<compile_context>
chip_gen: v7x
topology: tpu7x:2x2x1
jax: 0.10.0
libtpu: 0.0.40
codegen_flags: <defaults>
</compile_context>

<pallas_src>
import jax
import jax.numpy as jnp
from jax.experimental import pallas as pl
from jax.experimental.pallas import tpu as pltpu

D = 384          # embedding dim (MiniLM-L6-v2 hidden size)
NUM_DOCS = 3     # min(3, len(top_k_docs))
EPS = 1e-8       # torch cosine_similarity eps


def _round_up(x, m):
    return ((x + m - 1) // m) * m


def _make_loss_kernel(alpha, beta, gamma, dim, num_docs):
    alpha = float(alpha)
    beta = float(beta)
    gamma = float(gamma)
    eps2 = EPS * EPS
    inv_k = 1.0 / float(num_docs)

    def kernel(q_ref, o_ref, g_ref, d_ref, out_ref):
        # Feature-major blocks: q/o/g (dim, bt) bf16, d (num_docs*dim, bt) bf16.
        f32 = jnp.float32

        def rsum(x):
            # Reduce over the feature (sublane) axis: VALU vreg adds plus a tiny sublane
            # reduce; the (1, bt) result lands lane-major, matching out_ref's layout.
            return jnp.sum(x, axis=0, keepdims=True)

        def cos(dot, n2a, n2b):
            # torch.cosine_similarity semantics: dot / max(|a|*|b|, eps)  (product clamp).
            return dot * jax.lax.rsqrt(jnp.maximum(n2a * n2b, eps2))

        q = q_ref[...].astype(f32)
        o = o_ref[...].astype(f32)
        g = g_ref[...].astype(f32)

        qq = rsum(q * q)
        oo = rsum(o * o)
        gg = rsum(g * g)

        sim_qg = cos(rsum(q * g), qq, gg)
        sim_qo = cos(rsum(q * o), qq, oo)
        sim_og = cos(rsum(o * g), oo, gg)

        # Static unrolled loop over the K sampled docs: aligned 2-D slices of the flat
        # (K*D, bt) block; no (bt, K, D) broadcast temporary.
        acc = jnp.zeros_like(sim_qg)
        for k in range(num_docs):
            dk = d_ref[k * dim:(k + 1) * dim, :].astype(f32)
            acc = acc + cos(rsum(q * dk), qq, rsum(dk * dk))
        avg_sim = acc * inv_k

        l1 = sim_qo - sim_qg          # -(sim_qg - sim_qo)
        l2 = avg_sim - sim_qg         # -(sim_qg - avg_sim)
        l3 = 1.0 - sim_og
        out_ref[...] = (alpha * l1 + beta * l2 + gamma * l3).astype(out_ref.dtype)

    return kernel


def similarity_loss_fm(q_fm, o_fm, g_fm, d_fm, alpha=1.0, beta=1.0, gamma=1.0,
                       block_b=2048):
    """Feature-major batched loss (the fast path).

    q_fm/o_fm/g_fm: (D, B); d_fm: (K*D, B). Stored/streamed as bf16. Returns (B,) f32.
    """
    dim, B = q_fm.shape
    kd = d_fm.shape[0]
    assert kd % dim == 0
    k = kd // dim

    q = q_fm.astype(jnp.bfloat16)
    o = o_fm.astype(jnp.bfloat16)
    g = g_fm.astype(jnp.bfloat16)
    d = d_fm.astype(jnp.bfloat16)

    if B <= 128:
        bt = B                      # full-array lane block: single step, no padding
    else:
        # Lane-aligned tile, clamped so the grid has >= 2 steps (v7x megacore sharding).
        # No padding: the trailing partial block's extra lanes are discarded.
        bt = max(128, min(_round_up(block_b, 128), _round_up(pl.cdiv(B, 2), 128)))
    grid = (pl.cdiv(B, bt),)

    # Explicit VMEM budget: double-buffered bf16 input blocks plus room for the f32
    # upcasts/products the kernel materializes, with headroom below v7x's 64 MiB/TC
    # (also fixes the v5e 16 MiB scoped-VMEM default for large tiles).
    in_block_bytes = bt * (3 + k) * dim * 2
    f32_block_bytes = bt * dim * 4
    vmem_limit = 2 * in_block_bytes + 8 * f32_block_bytes + (4 << 20)
    vmem_limit = int(min(max(vmem_limit, 16 << 20), 56 << 20))

    out = pl.pallas_call(
        _make_loss_kernel(alpha, beta, gamma, dim, k),
        out_shape=jax.ShapeDtypeStruct((1, B), jnp.float32),
        grid_spec=pltpu.PrefetchScalarGridSpec(
            num_scalar_prefetch=0,
            grid=grid,
            in_specs=[
                pl.BlockSpec((dim, bt), lambda i: (0, i)),
                pl.BlockSpec((dim, bt), lambda i: (0, i)),
                pl.BlockSpec((dim, bt), lambda i: (0, i)),
                pl.BlockSpec((kd, bt), lambda i: (0, i)),
            ],
            out_specs=pl.BlockSpec((1, bt), lambda i: (0, i)),
        ),
        compiler_params=pltpu.CompilerParams(
            dimension_semantics=("parallel",),   # shard batch tiles over v7x's 2 TCs
            vmem_limit_bytes=vmem_limit,
        ),
    )(q, o, g, d)
    return out[0, :]


def similarity_loss_batched(query_emb, orig_emb, gen_emb, doc_embs,
                            alpha=1.0, beta=1.0, gamma=1.0, block_b=2048):
    """Batch-major convenience wrapper: query/orig/gen (B, D) and doc_embs (B, K, D).

    NOTE: the transpose to feature-major costs one extra HBM pass; an encoder that can
    emit (D, B) / (K*D, B) embeddings directly should call similarity_loss_fm instead.
    """
    B, dim = query_emb.shape
    k = doc_embs.shape[1]
    q_fm = jnp.transpose(query_emb, (1, 0))
    o_fm = jnp.transpose(orig_emb, (1, 0))
    g_fm = jnp.transpose(gen_emb, (1, 0))
    d_fm = jnp.transpose(doc_embs.reshape(B, k * dim), (1, 0))
    return similarity_loss_fm(q_fm, o_fm, g_fm, d_fm, alpha=alpha, beta=beta,
                              gamma=gamma, block_b=block_b)


def similarity_loss(query_emb, orig_emb, gen_emb, doc_embs,
                    alpha=1.0, beta=1.0, gamma=1.0):
    """Single-example convenience wrapper matching the PyTorch module's forward()."""
    loss = similarity_loss_batched(query_emb[None], orig_emb[None], gen_emb[None],
                                   doc_embs[None], alpha=alpha, beta=beta, gamma=gamma)
    return loss[0]


def _reference_batched(q, o, g, d, alpha, beta, gamma):
    # Mirrors torch.nn.functional.cosine_similarity(dim=0) per example, in f32.
    def cos_rows(a, b):
        na = jnp.sqrt(jnp.sum(a * a, axis=-1))
        nb = jnp.sqrt(jnp.sum(b * b, axis=-1))
        return jnp.sum(a * b, axis=-1) / jnp.maximum(na * nb, EPS)

    sim_qg = cos_rows(q, g)
    sim_qo = cos_rows(q, o)
    sim_og = cos_rows(o, g)
    avg = jnp.mean(jnp.stack([cos_rows(q, d[:, kk, :]) for kk in range(d.shape[1])],
                             axis=0), axis=0)
    l1 = -(sim_qg - sim_qo)
    l2 = -(sim_qg - avg)
    l3 = 1.0 - sim_og
    return alpha * l1 + beta * l2 + gamma * l3


if __name__ == "__main__":
    key = jax.random.PRNGKey(0)
    alpha, beta, gamma = 1.0, 0.5, 2.0

    # Tiny batch (matches the module's single-tuple forward, batched) plus a multi-tile
    # batch that exercises the >=2-step grid and a partial trailing block.
    for B in (4, 260):
        kq, ko, kg, kd, key = jax.random.split(key, 5)
        # Deterministic synthetic MiniLM-style sentence embeddings (encoder stand-ins),
        # rounded to bf16 up front since bf16 is the kernel's storage dtype.
        query_emb = jax.random.normal(kq, (B, D), jnp.float32).astype(jnp.bfloat16)
        orig_emb = jax.random.normal(ko, (B, D), jnp.float32).astype(jnp.bfloat16)
        gen_emb = (0.8 * orig_emb.astype(jnp.float32)
                   + 0.2 * jax.random.normal(kg, (B, D), jnp.float32)).astype(jnp.bfloat16)
        doc_embs = jax.random.normal(kd, (B, NUM_DOCS, D), jnp.float32).astype(jnp.bfloat16)

        losses = similarity_loss_batched(query_emb, orig_emb, gen_emb, doc_embs,
                                         alpha=alpha, beta=beta, gamma=gamma)
        losses = jax.block_until_ready(losses)

        ref = _reference_batched(query_emb.astype(jnp.float32),
                                 orig_emb.astype(jnp.float32),
                                 gen_emb.astype(jnp.float32),
                                 doc_embs.astype(jnp.float32),
                                 alpha, beta, gamma)

        assert losses.shape == (B,), losses.shape
        assert jnp.allclose(losses, ref, atol=2e-4, rtol=2e-4), (B, losses, ref)

    print("KERNEL_OK")
</pallas_src>

<mosaic_0001>
module attributes {stable_mosaic.version = 11 : i64} {
  func.func @kernel(%arg0: i32, %arg1: memref<384x4xbf16, #tpu.memory_space<vmem>>, %arg2: memref<384x4xbf16, #tpu.memory_space<vmem>>, %arg3: memref<384x4xbf16, #tpu.memory_space<vmem>>, %arg4: memref<1152x4xbf16, #tpu.memory_space<vmem>>, %arg5: memref<1x4xf32, #tpu.memory_space<vmem>>) attributes {dimension_semantics = [#tpu.dimension_semantics<parallel>], iteration_bounds = array<i64: 1>, scalar_prefetch = 0 : i64, scratch_operands = 0 : i64, tpu.core_type = #tpu.core_type<tc>, window_params = [{transform_indices = @transform_0, window_bounds = array<i64: 384, 4>}, {transform_indices = @transform_1, window_bounds = array<i64: 384, 4>}, {transform_indices = @transform_2, window_bounds = array<i64: 384, 4>}, {transform_indices = @transform_3, window_bounds = array<i64: 1152, 4>}, {transform_indices = @transform_4, window_bounds = array<i64: 1, 4>}]} {
    %c0 = arith.constant 0 : index
    %c0_0 = arith.constant 0 : index
    %0 = vector.load %arg1[%c0, %c0_0] : memref<384x4xbf16, #tpu.memory_space<vmem>>, vector<384x4xbf16>
    %1 = arith.extf %0 : vector<384x4xbf16> to vector<384x4xf32>
    %c0_1 = arith.constant 0 : index
    %c0_2 = arith.constant 0 : index
    %2 = vector.load %arg2[%c0_1, %c0_2] : memref<384x4xbf16, #tpu.memory_space<vmem>>, vector<384x4xbf16>
    %3 = arith.extf %2 : vector<384x4xbf16> to vector<384x4xf32>
    %c0_3 = arith.constant 0 : index
    %c0_4 = arith.constant 0 : index
    %4 = vector.load %arg3[%c0_3, %c0_4] : memref<384x4xbf16, #tpu.memory_space<vmem>>, vector<384x4xbf16>
    %5 = arith.extf %4 : vector<384x4xbf16> to vector<384x4xf32>
    %6 = arith.mulf %1, %1 : vector<384x4xf32>
    %cst = arith.constant dense<0.000000e+00> : vector<4xf32>
    %7 = vector.multi_reduction <add>, %6, %cst [0] : vector<384x4xf32> to vector<4xf32>
    %8 = vector.shape_cast %7 : vector<4xf32> to vector<1x4xf32>
    %9 = arith.mulf %3, %3 : vector<384x4xf32>
    %cst_5 = arith.constant dense<0.000000e+00> : vector<4xf32>
    %10 = vector.multi_reduction <add>, %9, %cst_5 [0] : vector<384x4xf32> to vector<4xf32>
    %11 = vector.shape_cast %10 : vector<4xf32> to vector<1x4xf32>
    %12 = arith.mulf %5, %5 : vector<384x4xf32>
    %cst_6 = arith.constant dense<0.000000e+00> : vector<4xf32>
    %13 = vector.multi_reduction <add>, %12, %cst_6 [0] : vector<384x4xf32> to vector<4xf32>
    %14 = vector.shape_cast %13 : vector<4xf32> to vector<1x4xf32>
    %15 = arith.mulf %1, %5 : vector<384x4xf32>
    %cst_7 = arith.constant dense<0.000000e+00> : vector<4xf32>
    %16 = vector.multi_reduction <add>, %15, %cst_7 [0] : vector<384x4xf32> to vector<4xf32>
    %17 = vector.shape_cast %16 : vector<4xf32> to vector<1x4xf32>
    %18 = arith.mulf %8, %14 : vector<1x4xf32>
    %cst_8 = arith.constant 1.000000e-16 : f32
    %19 = vector.broadcast %cst_8 : f32 to vector<1x4xf32>
    %20 = arith.maximumf %18, %19 : vector<1x4xf32>
    %21 = math.rsqrt %20 : vector<1x4xf32>
    %22 = arith.mulf %17, %21 : vector<1x4xf32>
    %23 = arith.mulf %1, %3 : vector<384x4xf32>
    %cst_9 = arith.constant dense<0.000000e+00> : vector<4xf32>
    %24 = vector.multi_reduction <add>, %23, %cst_9 [0] : vector<384x4xf32> to vector<4xf32>
    %25 = vector.shape_cast %24 : vector<4xf32> to vector<1x4xf32>
    %26 = arith.mulf %8, %11 : vector<1x4xf32>
    %cst_10 = arith.constant 1.000000e-16 : f32
    %27 = vector.broadcast %cst_10 : f32 to vector<1x4xf32>
    %28 = arith.maximumf %26, %27 : vector<1x4xf32>
    %29 = math.rsqrt %28 : vector<1x4xf32>
    %30 = arith.mulf %25, %29 : vector<1x4xf32>
    %31 = arith.mulf %3, %5 : vector<384x4xf32>
    %cst_11 = arith.constant dense<0.000000e+00> : vector<4xf32>
    %32 = vector.multi_reduction <add>, %31, %cst_11 [0] : vector<384x4xf32> to vector<4xf32>
    %33 = vector.shape_cast %32 : vector<4xf32> to vector<1x4xf32>
    %34 = arith.mulf %11, %14 : vector<1x4xf32>
    %cst_12 = arith.constant 1.000000e-16 : f32
    %35 = vector.broadcast %cst_12 : f32 to vector<1x4xf32>
    %36 = arith.maximumf %34, %35 : vector<1x4xf32>
    %37 = math.rsqrt %36 : vector<1x4xf32>
    %38 = arith.mulf %33, %37 : vector<1x4xf32>
    %cst_13 = arith.constant 0.000000e+00 : f32
    %39 = vector.broadcast %cst_13 : f32 to vector<1x4xf32>
    %c0_14 = arith.constant 0 : index
    %c0_15 = arith.constant 0 : index
    %40 = vector.load %arg4[%c0_14, %c0_15] : memref<1152x4xbf16, #tpu.memory_space<vmem>>, vector<384x4xbf16>
    %41 = arith.extf %40 : vector<384x4xbf16> to vector<384x4xf32>
    %42 = arith.mulf %1, %41 : vector<384x4xf32>
    %cst_16 = arith.constant dense<0.000000e+00> : vector<4xf32>
    %43 = vector.multi_reduction <add>, %42, %cst_16 [0] : vector<384x4xf32> to vector<4xf32>
    %44 = vector.shape_cast %43 : vector<4xf32> to vector<1x4xf32>
    %45 = arith.mulf %41, %41 : vector<384x4xf32>
    %cst_17 = arith.constant dense<0.000000e+00> : vector<4xf32>
    %46 = vector.multi_reduction <add>, %45, %cst_17 [0] : vector<384x4xf32> to vector<4xf32>
    %47 = vector.shape_cast %46 : vector<4xf32> to vector<1x4xf32>
    %48 = arith.mulf %8, %47 : vector<1x4xf32>
    %cst_18 = arith.constant 1.000000e-16 : f32
    %49 = vector.broadcast %cst_18 : f32 to vector<1x4xf32>
    %50 = arith.maximumf %48, %49 : vector<1x4xf32>
    %51 = math.rsqrt %50 : vector<1x4xf32>
    %52 = arith.mulf %44, %51 : vector<1x4xf32>
    %53 = arith.addf %39, %52 : vector<1x4xf32>
    %c384 = arith.constant 384 : index
    %c0_19 = arith.constant 0 : index
    %54 = vector.load %arg4[%c384, %c0_19] : memref<1152x4xbf16, #tpu.memory_space<vmem>>, vector<384x4xbf16>
    %55 = arith.extf %54 : vector<384x4xbf16> to vector<384x4xf32>
    %56 = arith.mulf %1, %55 : vector<384x4xf32>
    %cst_20 = arith.constant dense<0.000000e+00> : vector<4xf32>
    %57 = vector.multi_reduction <add>, %56, %cst_20 [0] : vector<384x4xf32> to vector<4xf32>
    %58 = vector.shape_cast %57 : vector<4xf32> to vector<1x4xf32>
    %59 = arith.mulf %55, %55 : vector<384x4xf32>
    %cst_21 = arith.constant dense<0.000000e+00> : vector<4xf32>
    %60 = vector.multi_reduction <add>, %59, %cst_21 [0] : vector<384x4xf32> to vector<4xf32>
    %61 = vector.shape_cast %60 : vector<4xf32> to vector<1x4xf32>
    %62 = arith.mulf %8, %61 : vector<1x4xf32>
    %cst_22 = arith.constant 1.000000e-16 : f32
    %63 = vector.broadcast %cst_22 : f32 to vector<1x4xf32>
    %64 = arith.maximumf %62, %63 : vector<1x4xf32>
    %65 = math.rsqrt %64 : vector<1x4xf32>
    %66 = arith.mulf %58, %65 : vector<1x4xf32>
    %67 = arith.addf %53, %66 : vector<1x4xf32>
    %c768 = arith.constant 768 : index
    %c0_23 = arith.constant 0 : index
    %68 = vector.load %arg4[%c768, %c0_23] : memref<1152x4xbf16, #tpu.memory_space<vmem>>, vector<384x4xbf16>
    %69 = arith.extf %68 : vector<384x4xbf16> to vector<384x4xf32>
    %70 = arith.mulf %1, %69 : vector<384x4xf32>
    %cst_24 = arith.constant dense<0.000000e+00> : vector<4xf32>
    %71 = vector.multi_reduction <add>, %70, %cst_24 [0] : vector<384x4xf32> to vector<4xf32>
    %72 = vector.shape_cast %71 : vector<4xf32> to vector<1x4xf32>
    %73 = arith.mulf %69, %69 : vector<384x4xf32>
    %cst_25 = arith.constant dense<0.000000e+00> : vector<4xf32>
    %74 = vector.multi_reduction <add>, %73, %cst_25 [0] : vector<384x4xf32> to vector<4xf32>
    %75 = vector.shape_cast %74 : vector<4xf32> to vector<1x4xf32>
    %76 = arith.mulf %8, %75 : vector<1x4xf32>
    %cst_26 = arith.constant 1.000000e-16 : f32
    %77 = vector.broadcast %cst_26 : f32 to vector<1x4xf32>
    %78 = arith.maximumf %76, %77 : vector<1x4xf32>
    %79 = math.rsqrt %78 : vector<1x4xf32>
    %80 = arith.mulf %72, %79 : vector<1x4xf32>
    %81 = arith.addf %67, %80 : vector<1x4xf32>
    %cst_27 = arith.constant 0.333333343 : f32
    %82 = vector.broadcast %cst_27 : f32 to vector<1x4xf32>
    %83 = arith.mulf %81, %82 : vector<1x4xf32>
    %84 = arith.subf %30, %22 : vector<1x4xf32>
    %85 = arith.subf %83, %22 : vector<1x4xf32>
    %cst_28 = arith.constant 1.000000e+00 : f32
    %86 = vector.broadcast %cst_28 : f32 to vector<1x4xf32>
    %87 = arith.subf %86, %38 : vector<1x4xf32>
    %cst_29 = arith.constant 1.000000e+00 : f32
    %88 = vector.broadcast %cst_29 : f32 to vector<1x4xf32>
    %89 = arith.mulf %88, %84 : vector<1x4xf32>
    %cst_30 = arith.constant 5.000000e-01 : f32
    %90 = vector.broadcast %cst_30 : f32 to vector<1x4xf32>
    %91 = arith.mulf %90, %85 : vector<1x4xf32>
    %92 = arith.addf %89, %91 : vector<1x4xf32>
    %cst_31 = arith.constant 2.000000e+00 : f32
    %93 = vector.broadcast %cst_31 : f32 to vector<1x4xf32>
    %94 = arith.mulf %93, %87 : vector<1x4xf32>
    %95 = arith.addf %92, %94 : vector<1x4xf32>
    %c0_32 = arith.constant 0 : index
    %c0_33 = arith.constant 0 : index
    %96 = vector.load %arg5[%c0_32, %c0_33] : memref<1x4xf32, #tpu.memory_space<vmem>>, vector<1x4xf32>
    tpu.vector_store %arg5[%c0_32, %c0_33], %95 {strides = array<i32>} : memref<1x4xf32, #tpu.memory_space<vmem>>, vector<1x4xf32>,
    return
  }
  func.func @transform_0(%arg0: i32) -> (i32, i32) {
    %c0_i32 = arith.constant 0 : i32
    %c0_i32_0 = arith.constant 0 : i32
    return %c0_i32, %arg0 : i32, i32
  }
  func.func @transform_1(%arg0: i32) -> (i32, i32) {
    %c0_i32 = arith.constant 0 : i32
    %c0_i32_0 = arith.constant 0 : i32
    return %c0_i32, %arg0 : i32, i32
  }
  func.func @transform_2(%arg0: i32) -> (i32, i32) {
    %c0_i32 = arith.constant 0 : i32
    %c0_i32_0 = arith.constant 0 : i32
    return %c0_i32, %arg0 : i32, i32
  }
  func.func @transform_3(%arg0: i32) -> (i32, i32) {
    %c0_i32 = arith.constant 0 : i32
    %c0_i32_0 = arith.constant 0 : i32
    return %c0_i32, %arg0 : i32, i32
  }
  func.func @transform_4(%arg0: i32) -> (i32, i32) {
    %c0_i32 = arith.constant 0 : i32
    %c0_i32_0 = arith.constant 0 : i32
    return %c0_i32, %arg0 : i32, i32
  }
}

</mosaic_0001>

<llo_original>
// kernel: tpu_custom_call.1
$region0: #{tpu_custom_call.1}
  #allocation0 [shape = 'u32[]', space=smem, size = 0x4, offset = 0x4, fixed_abs, tag = 'smem constant byte address 0x4 - core index']
  #allocation1 [shape = 'u32[144,128]{1,0:T(1,128)}', space=vmem, size = 0x12000, scoped, tag = 'internal scratch']
  %s0 = inlined_call_operand.vmem [shape: bf16[384,4], index: 0, kind: input, shape index: {}]
  %s1 = inlined_call_operand.vmem [shape: bf16[384,4], index: 1, kind: input, shape index: {}]
  %s2 = inlined_call_operand.vmem [shape: bf16[384,4], index: 2, kind: input, shape index: {}]
  %s3 = inlined_call_operand.vmem [shape: bf16[1152,4], index: 3, kind: input, shape index: {}]
  %s4 = inlined_call_operand.hbm [shape: f32[1,4], index: 4, kind: output, shape index: {}]
  %s5 = sld [smem:[#allocation0]]
  $region26: #{tpu_custom_call.1} parent=0
    _
  %s7 = ssub.s32 1, %s5
  %s8 = scalar_select 0, %s7, %s5
  $region1: #{tpu_custom_call.1} parent=0
    #allocation2 [shape = 'u8[512]{0}', space=vmem, size = 0x400, scoped, tag = 'output window, operand 0, single buffered']
    #allocation3 [shape = 's32[1]{0}', space=sflag, size = 0x4, scoped, tag = 'scoped memory for tpu_custom_call.1']
    %9 = vsyncpa [#allocation3], 0
    // Predicated region
    $region2: #{tpu_custom_call.1} parent=1 // pred_check
      _
    $region3: #{tpu_custom_call.1} parent=1 // pred_check_branch
      %11 = sbr.rel (0) target = $region5
    $region4: #{tpu_custom_call.1} parent=1 // pred_region
      _
    $region5: #{tpu_custom_call.1} parent=1 // pred_fallthru
      _
    // Predicated region
    $region6: #{tpu_custom_call.1} parent=1 // pred_check
      _
    $region7: #{tpu_custom_call.1} parent=1 // pred_check_branch
      %13 = sbr.rel (0) target = $region9
    $region8: #{tpu_custom_call.1} parent=1 // pred_region
      _
    $region9: #{tpu_custom_call.1} parent=1 // pred_fallthru
      _
    // Predicated region
    $region10: #{tpu_custom_call.1} parent=1 // pred_check
      _
    $region11: #{tpu_custom_call.1} parent=1 // pred_check_branch
      %15 = sbr.rel (0) target = $region13
    $region12: #{tpu_custom_call.1} parent=1 // pred_region
      _
    $region13: #{tpu_custom_call.1} parent=1 // pred_fallthru
      _
    // Predicated region
    $region14: #{tpu_custom_call.1} parent=1 // pred_check
      _
    $region15: #{tpu_custom_call.1} parent=1 // pred_check_branch
      %17 = sbr.rel (0) target = $region17
    $region16: #{tpu_custom_call.1} parent=1 // pred_region
      _
    $region17: #{tpu_custom_call.1} parent=1 // pred_fallthru
      _
    %v18 = vld [vmem:[%s0] sm:$0xf]
    %v19 = vld [vmem:[%s0 + $0x4] sm:$0xf]
    %v20 = vld [vmem:[%s0 + $0x8] sm:$0xf]
    %v21 = vld [vmem:[%s0 + $0xc] sm:$0xf]
    %v22 = vld [vmem:[%s0 + $0x10] sm:$0xf]
    %v23 = vld [vmem:[%s0 + $0x14] sm:$0xf]
    %v24 = vld [vmem:[%s0 + $0x18] sm:$0xf]
    %v25 = vld [vmem:[%s0 + $0x1c] sm:$0xf]
    %v26 = vld [vmem:[%s0 + $0x20] sm:$0xf]
    %v27 = vld [vmem:[%s0 + $0x24] sm:$0xf]
    %v28 = vld [vmem:[%s0 + $0x28] sm:$0xf]
    %v29 = vld [vmem:[%s0 + $0x2c] sm:$0xf]
    %v30 = vld [vmem:[%s0 + $0x30] sm:$0xf]
    %v31 = vld [vmem:[%s0 + $0x34] sm:$0xf]
    %v32 = vld [vmem:[%s0 + $0x38] sm:$0xf]
    %v33 = vld [vmem:[%s0 + $0x3c] sm:$0xf]
    %v34 = vld [vmem:[%s0 + $0x40] sm:$0xf]
    %v35 = vld [vmem:[%s0 + $0x44] sm:$0xf]
    %v36 = vld [vmem:[%s0 + $0x48] sm:$0xf]
    %v37 = vld [vmem:[%s0 + $0x4c] sm:$0xf]
    %v38 = vld [vmem:[%s0 + $0x50] sm:$0xf]
    %v39 = vld [vmem:[%s0 + $0x54] sm:$0xf]
    %v40 = vld [vmem:[%s0 + $0x58] sm:$0xf]
    %v41 = vld [vmem:[%s0 + $0x5c] sm:$0xf]
    %v42 = vld [vmem:[%s0 + $0x60] sm:$0xf]
    %v43 = vld [vmem:[%s0 + $0x64] sm:$0xf]
    %v44 = vld [vmem:[%s0 + $0x68] sm:$0xf]
    %v45 = vld [vmem:[%s0 + $0x6c] sm:$0xf]
    %v46 = vld [vmem:[%s0 + $0x70] sm:$0xf]
    %v47 = vld [vmem:[%s0 + $0x74] sm:$0xf]
    %v48 = vld [vmem:[%s0 + $0x78] sm:$0xf]
    %v49 = vld [vmem:[%s0 + $0x7c] sm:$0xf]
    %v50 = vld [vmem:[%s0 + $0x80] sm:$0xf]
    %v51 = vld [vmem:[%s0 + $0x84] sm:$0xf]
    %v52 = vld [vmem:[%s0 + $0x88] sm:$0xf]
    %v53 = vld [vmem:[%s0 + $0x8c] sm:$0xf]
    %v54 = vld [vmem:[%s0 + $0x90] sm:$0xf]
    %v55 = vld [vmem:[%s0 + $0x94] sm:$0xf]
    %v56 = vld [vmem:[%s0 + $0x98] sm:$0xf]
    %v57 = vld [vmem:[%s0 + $0x9c] sm:$0xf]
    %v58 = vld [vmem:[%s0 + $0xa0] sm:$0xf]
    %v59 = vld [vmem:[%s0 + $0xa4] sm:$0xf]
    %v60 = vld [vmem:[%s0 + $0xa8] sm:$0xf]
    %v61 = vld [vmem:[%s0 + $0xac] sm:$0xf]
    %v62 = vld [vmem:[%s0 + $0xb0] sm:$0xf]
    %v63 = vld [vmem:[%s0 + $0xb4] sm:$0xf]
    %v64 = vld [vmem:[%s0 + $0xb8] sm:$0xf]
    %v65 = vld [vmem:[%s0 + $0xbc] sm:$0xf]
    %v66 = vunpack.c.l.bf16 %v18
    %v67 = vunpack.c.l.bf16 %v19
    %v68 = vunpack.c.l.bf16 %v20
    %v69 = vunpack.c.l.bf16 %v21
    %v70 = vunpack.c.l.bf16 %v22
    %v71 = vunpack.c.l.bf16 %v23
    %v72 = vunpack.c.l.bf16 %v24
    %v73 = vunpack.c.l.bf16 %v25
    %v74 = vunpack.c.l.bf16 %v26
    %v75 = vunpack.c.l.bf16 %v27
    %v76 = vunpack.c.l.bf16 %v28
    %v77 = vunpack.c.l.bf16 %v29
    %v78 = vunpack.c.l.bf16 %v30
    %v79 = vunpack.c.l.bf16 %v31
    %v80 = vunpack.c.l.bf16 %v32
    %v81 = vunpack.c.l.bf16 %v33
    %v82 = vunpack.c.l.bf16 %v34
    %v83 = vunpack.c.l.bf16 %v35
    %v84 = vunpack.c.l.bf16 %v36
    %v85 = vunpack.c.l.bf16 %v37
    %v86 = vunpack.c.l.bf16 %v38
    %v87 = vunpack.c.l.bf16 %v39
    %v88 = vunpack.c.l.bf16 %v40
    %v89 = vunpack.c.l.bf16 %v41
    %v90 = vunpack.c.l.bf16 %v42
    %v91 = vunpack.c.l.bf16 %v43
    %v92 = vunpack.c.l.bf16 %v44
    %v93 = vunpack.c.l.bf16 %v45
    %v94 = vunpack.c.l.bf16 %v46
    %v95 = vunpack.c.l.bf16 %v47
    %v96 = vunpack.c.l.bf16 %v48
    %v97 = vunpack.c.l.bf16 %v49
    %v98 = vunpack.c.l.bf16 %v50
    %v99 = vunpack.c.l.bf16 %v51
    %v100 = vunpack.c.l.bf16 %v52
    %v101 = vunpack.c.l.bf16 %v53
    %v102 = vunpack.c.l.bf16 %v54
    %v103 = vunpack.c.l.bf16 %v55
    %v104 = vunpack.c.l.bf16 %v56
    %v105 = vunpack.c.l.bf16 %v57
    %v106 = vunpack.c.l.bf16 %v58
    %v107 = vunpack.c.l.bf16 %v59
    %v108 = vunpack.c.l.bf16 %v60
    %v109 = vunpack.c.l.bf16 %v61
    %v110 = vunpack.c.l.bf16 %v62
    %v111 = vunpack.c.l.bf16 %v63
    %v112 = vunpack.c.l.bf16 %v64
    %v113 = vunpack.c.l.bf16 %v65
    %v114 = vld [vmem:[%s1] sm:$0xf]
    %v115 = vld [vmem:[%s1 + $0x4] sm:$0xf]
    %v116 = vld [vmem:[%s1 + $0x8] sm:$0xf]
    %v117 = vld [vmem:[%s1 + $0xc] sm:$0xf]
    %v118 = vld [vmem:[%s1 + $0x10] sm:$0xf]
    %v119 = vld [vmem:[%s1 + $0x14] sm:$0xf]
    %v120 = vld [vmem:[%s1 + $0x18] sm:$0xf]
    %v121 = vld [vmem:[%s1 + $0x1c] sm:$0xf]
    %v122 = vld [vmem:[%s1 + $0x20] sm:$0xf]
    %v123 = vld [vmem:[%s1 + $0x24] sm:$0xf]
    %v124 = vld [vmem:[%s1 + $0x28] sm:$0xf]
    %v125 = vld [vmem:[%s1 + $0x2c] sm:$0xf]
    %v126 = vld [vmem:[%s1 + $0x30] sm:$0xf]
    %v127 = vld [vmem:[%s1 + $0x34] sm:$0xf]
    %v128 = vld [vmem:[%s1 + $0x38] sm:$0xf]
    %v129 = vld [vmem:[%s1 + $0x3c] sm:$0xf]
    %v130 = vld [vmem:[%s1 + $0x40] sm:$0xf]
    %v131 = vld [vmem:[%s1 + $0x44] sm:$0xf]
    %v132 = vld [vmem:[%s1 + $0x48] sm:$0xf]
    %v133 = vld [vmem:[%s1 + $0x4c] sm:$0xf]
    %v134 = vld [vmem:[%s1 + $0x50] sm:$0xf]
    %v135 = vld [vmem:[%s1 + $0x54] sm:$0xf]
    %v136 = vld [vmem:[%s1 + $0x58] sm:$0xf]
    %v137 = vld [vmem:[%s1 + $0x5c] sm:$0xf]
    %v138 = vld [vmem:[%s1 + $0x60] sm:$0xf]
    %v139 = vld [vmem:[%s1 + $0x64] sm:$0xf]
    %v140 = vld [vmem:[%s1 + $0x68] sm:$0xf]
    %v141 = vld [vmem:[%s1 + $0x6c] sm:$0xf]
    %v142 = vld [vmem:[%s1 + $0x70] sm:$0xf]
    %v143 = vld [vmem:[%s1 + $0x74] sm:$0xf]
    %v144 = vld [vmem:[%s1 + $0x78] sm:$0xf]
    %v145 = vld [vmem:[%s1 + $0x7c] sm:$0xf]
    %v146 = vld [vmem:[%s1 + $0x80] sm:$0xf]
    %v147 = vld [vmem:[%s1 + $0x84] sm:$0xf]
    %v148 = vld [vmem:[%s1 + $0x88] sm:$0xf]
    %v149 = vld [vmem:[%s1 + $0x8c] sm:$0xf]
    %v150 = vld [vmem:[%s1 + $0x90] sm:$0xf]
    %v151 = vld [vmem:[%s1 + $0x94] sm:$0xf]
    %v152 = vld [vmem:[%s1 + $0x98] sm:$0xf]
    %v153 = vld [vmem:[%s1 + $0x9c] sm:$0xf]
    %v154 = vld [vmem:[%s1 + $0xa0] sm:$0xf]
    %v155 = vld [vmem:[%s1 + $0xa4] sm:$0xf]
    %v156 = vld [vmem:[%s1 + $0xa8] sm:$0xf]
    %v157 = vld [vmem:[%s1 + $0xac] sm:$0xf]
    %v158 = vld [vmem:[%s1 + $0xb0] sm:$0xf]
    %v159 = vld [vmem:[%s1 + $0xb4] sm:$0xf]
    %v160 = vld [vmem:[%s1 + $0xb8] sm:$0xf]
    %v161 = vld [vmem:[%s1 + $0xbc] sm:$0xf]
    %v162 = vunpack.c.l.bf16 %v114
    %v163 = vunpack.c.l.bf16 %v115
    %v164 = vunpack.c.l.bf16 %v116
    %v165 = vunpack.c.l.bf16 %v117
    %v166 = vunpack.c.l.bf16 %v118
    %v167 = vunpack.c.l.bf16 %v119
    %v168 = vunpack.c.l.bf16 %v120
    %v169 = vunpack.c.l.bf16 %v121
    %v170 = vunpack.c.l.bf16 %v122
    %v171 = vunpack.c.l.bf16 %v123
    %v172 = vunpack.c.l.bf16 %v124
    %v173 = vunpack.c.l.bf16 %v125
    %v174 = vunpack.c.l.bf16 %v126
    %v175 = vunpack.c.l.bf16 %v127
    %v176 = vunpack.c.l.bf16 %v128
    %v177 = vunpack.c.l.bf16 %v129
    %v178 = vunpack.c.l.bf16 %v130
    %v179 = vunpack.c.l.bf16 %v131
    %v180 = vunpack.c.l.bf16 %v132
    %v181 = vunpack.c.l.bf16 %v133
    %v182 = vunpack.c.l.bf16 %v134
    %v183 = vunpack.c.l.bf16 %v135
    %v184 = vunpack.c.l.bf16 %v136
    %v185 = vunpack.c.l.bf16 %v137
    %v186 = vunpack.c.l.bf16 %v138
    %v187 = vunpack.c.l.bf16 %v139
    %v188 = vunpack.c.l.bf16 %v140
    %v189 = vunpack.c.l.bf16 %v141
    %v190 = vunpack.c.l.bf16 %v142
    %v191 = vunpack.c.l.bf16 %v143
    %v192 = vunpack.c.l.bf16 %v144
    %v193 = vunpack.c.l.bf16 %v145
    %v194 = vunpack.c.l.bf16 %v146
    %v195 = vunpack.c.l.bf16 %v147
    %v196 = vunpack.c.l.bf16 %v148
    %v197 = vunpack.c.l.bf16 %v149
    %v198 = vunpack.c.l.bf16 %v150
    %v199 = vunpack.c.l.bf16 %v151
    %v200 = vunpack.c.l.bf16 %v152
    %v201 = vunpack.c.l.bf16 %v153
    %v202 = vunpack.c.l.bf16 %v154
    %v203 = vunpack.c.l.bf16 %v155
    %v204 = vunpack.c.l.bf16 %v156
    %v205 = vunpack.c.l.bf16 %v157
    %v206 = vunpack.c.l.bf16 %v158
    %v207 = vunpack.c.l.bf16 %v159
    %v208 = vunpack.c.l.bf16 %v160
    %v209 = vunpack.c.l.bf16 %v161
    %v210 = vld [vmem:[%s2] sm:$0xf]
    %v211 = vld [vmem:[%s2 + $0x4] sm:$0xf]
    %v212 = vld [vmem:[%s2 + $0x8] sm:$0xf]
    %v213 = vld [vmem:[%s2 + $0xc] sm:$0xf]
    %v214 = vld [vmem:[%s2 + $0x10] sm:$0xf]
    %v215 = vld [vmem:[%s2 + $0x14] sm:$0xf]
    %v216 = vld [vmem:[%s2 + $0x18] sm:$0xf]
    %v217 = vld [vmem:[%s2 + $0x1c] sm:$0xf]
    %v218 = vld [vmem:[%s2 + $0x20] sm:$0xf]
    %v219 = vld [vmem:[%s2 + $0x24] sm:$0xf]
    %v220 = vld [vmem:[%s2 + $0x28] sm:$0xf]
    %v221 = vld [vmem:[%s2 + $0x2c] sm:$0xf]
    %v222 = vld [vmem:[%s2 + $0x30] sm:$0xf]
    %v223 = vld [vmem:[%s2 + $0x34] sm:$0xf]
    %v224 = vld [vmem:[%s2 + $0x38] sm:$0xf]
    %v225 = vld [vmem:[%s2 + $0x3c] sm:$0xf]
    %v226 = vld [vmem:[%s2 + $0x40] sm:$0xf]
    %v227 = vld [vmem:[%s2 + $0x44] sm:$0xf]
    %v228 = vld [vmem:[%s2 + $0x48] sm:$0xf]
    %v229 = vld [vmem:[%s2 + $0x4c] sm:$0xf]
    %v230 = vld [vmem:[%s2 + $0x50] sm:$0xf]
    %v231 = vld [vmem:[%s2 + $0x54] sm:$0xf]
    %v232 = vld [vmem:[%s2 + $0x58] sm:$0xf]
    %v233 = vld [vmem:[%s2 + $0x5c] sm:$0xf]
    %v234 = vld [vmem:[%s2 + $0x60] sm:$0xf]
    %v235 = vld [vmem:[%s2 + $0x64] sm:$0xf]
    %v236 = vld [vmem:[%s2 + $0x68] sm:$0xf]
    %v237 = vld [vmem:[%s2 + $0x6c] sm:$0xf]
    %v238 = vld [vmem:[%s2 + $0x70] sm:$0xf]
    %v239 = vld [vmem:[%s2 + $0x74] sm:$0xf]
    %v240 = vld [vmem:[%s2 + $0x78] sm:$0xf]
    %v241 = vld [vmem:[%s2 + $0x7c] sm:$0xf]
    %v242 = vld [vmem:[%s2 + $0x80] sm:$0xf]
    %v243 = vld [vmem:[%s2 + $0x84] sm:$0xf]
    %v244 = vld [vmem:[%s2 + $0x88] sm:$0xf]
    %v245 = vld [vmem:[%s2 + $0x8c] sm:$0xf]
    %v246 = vld [vmem:[%s2 + $0x90] sm:$0xf]
    %v247 = vld [vmem:[%s2 + $0x94] sm:$0xf]
    %v248 = vld [vmem:[%s2 + $0x98] sm:$0xf]
    %v249 = vld [vmem:[%s2 + $0x9c] sm:$0xf]
    %v250 = vld [vmem:[%s2 + $0xa0] sm:$0xf]
    %v251 = vld [vmem:[%s2 + $0xa4] sm:$0xf]
    %v252 = vld [vmem:[%s2 + $0xa8] sm:$0xf]
    %v253 = vld [vmem:[%s2 + $0xac] sm:$0xf]
    %v254 = vld [vmem:[%s2 + $0xb0] sm:$0xf]
    %v255 = vld [vmem:[%s2 + $0xb4] sm:$0xf]
    %v256 = vld [vmem:[%s2 + $0xb8] sm:$0xf]
    %v257 = vld [vmem:[%s2 + $0xbc] sm:$0xf]
    %v258 = vunpack.c.l.bf16 %v210
    %v259 = vunpack.c.l.bf16 %v211
    %v260 = vunpack.c.l.bf16 %v212
    %v261 = vunpack.c.l.bf16 %v213
    %v262 = vunpack.c.l.bf16 %v214
    %v263 = vunpack.c.l.bf16 %v215
    %v264 = vunpack.c.l.bf16 %v216
    %v265 = vunpack.c.l.bf16 %v217
    %v266 = vunpack.c.l.bf16 %v218
    %v267 = vunpack.c.l.bf16 %v219
    %v268 = vunpack.c.l.bf16 %v220
    %v269 = vunpack.c.l.bf16 %v221
    %v270 = vunpack.c.l.bf16 %v222
    %v271 = vunpack.c.l.bf16 %v223
    %v272 = vunpack.c.l.bf16 %v224
    %v273 = vunpack.c.l.bf16 %v225
    %v274 = vunpack.c.l.bf16 %v226
    %v275 = vunpack.c.l.bf16 %v227
    %v276 = vunpack.c.l.bf16 %v228
    %v277 = vunpack.c.l.bf16 %v229
    %v278 = vunpack.c.l.bf16 %v230
    %v279 = vunpack.c.l.bf16 %v231
    %v280 = vunpack.c.l.bf16 %v232
    %v281 = vunpack.c.l.bf16 %v233
    %v282 = vunpack.c.l.bf16 %v234
    %v283 = vunpack.c.l.bf16 %v235
    %v284 = vunpack.c.l.bf16 %v236
    %v285 = vunpack.c.l.bf16 %v237
    %v286 = vunpack.c.l.bf16 %v238
    %v287 = vunpack.c.l.bf16 %v239
    %v288 = vunpack.c.l.bf16 %v240
    %v289 = vunpack.c.l.bf16 %v241
    %v290 = vunpack.c.l.bf16 %v242
    %v291 = vunpack.c.l.bf16 %v243
    %v292 = vunpack.c.l.bf16 %v244
    %v293 = vunpack.c.l.bf16 %v245
    %v294 = vunpack.c.l.bf16 %v246
    %v295 = vunpack.c.l.bf16 %v247
    %v296 = vunpack.c.l.bf16 %v248
    %v297 = vunpack.c.l.bf16 %v249
    %v298 = vunpack.c.l.bf16 %v250
    %v299 = vunpack.c.l.bf16 %v251
    %v300 = vunpack.c.l.bf16 %v252
    %v301 = vunpack.c.l.bf16 %v253
    %v302 = vunpack.c.l.bf16 %v254
    %v303 = vunpack.c.l.bf16 %v255
    %v304 = vunpack.c.l.bf16 %v256
    %v305 = vunpack.c.l.bf16 %v257
    %v306 = vmul.f32 %v66, %v66
    %v307 = vmul.f32 %v67, %v67
    %v308 = vmul.f32 %v68, %v68
    %v309 = vmul.f32 %v69, %v69
    %v310 = vmul.f32 %v70, %v70
    %v311 = vmul.f32 %v71, %v71
    %v312 = vmul.f32 %v72, %v72
    %v313 = vmul.f32 %v73, %v73
    %v314 = vmul.f32 %v74, %v74
    %v315 = vmul.f32 %v75, %v75
    %v316 = vmul.f32 %v76, %v76
    %v317 = vmul.f32 %v77, %v77
    %v318 = vmul.f32 %v78, %v78
    %v319 = vmul.f32 %v79, %v79
    %v320 = vmul.f32 %v80, %v80
    %v321 = vmul.f32 %v81, %v81
    %v322 = vmul.f32 %v82, %v82
    %v323 = vmul.f32 %v83, %v83
    %v324 = vmul.f32 %v84, %v84
    %v325 = vmul.f32 %v85, %v85
    %v326 = vmul.f32 %v86, %v86
    %v327 = vmul.f32 %v87, %v87
    %v328 = vmul.f32 %v88, %v88
    %v329 = vmul.f32 %v89, %v89
    %v330 = vmul.f32 %v90, %v90
    %v331 = vmul.f32 %v91, %v91
    %v332 = vmul.f32 %v92, %v92
    %v333 = vmul.f32 %v93, %v93
    %v334 = vmul.f32 %v94, %v94
    %v335 = vmul.f32 %v95, %v95
    %v336 = vmul.f32 %v96, %v96
    %v337 = vmul.f32 %v97, %v97
    %v338 = vmul.f32 %v98, %v98
    %v339 = vmul.f32 %v99, %v99
    %v340 = vmul.f32 %v100, %v100
    %v341 = vmul.f32 %v101, %v101
    %v342 = vmul.f32 %v102, %v102
    %v343 = vmul.f32 %v103, %v103
    %v344 = vmul.f32 %v104, %v104
    %v345 = vmul.f32 %v105, %v105
    %v346 = vmul.f32 %v106, %v106
    %v347 = vmul.f32 %v107, %v107
    %v348 = vmul.f32 %v108, %v108
    %v349 = vmul.f32 %v109, %v109
    %v350 = vmul.f32 %v110, %v110
    %v351 = vmul.f32 %v111, %v111
    %v352 = vmul.f32 %v112, %v112
    %v353 = vmul.f32 %v113, %v113
    %vm354 = vcmask 31744
    %v355 = vsel %vm354, %v306, 0.0
    %v356 = vsel %vm354, %v307, 0.0
    %v357 = vadd.f32 %v355, %v356
    %v358 = vsel %vm354, %v308, 0.0
    %v359 = vadd.f32 %v357, %v358
    %v360 = vsel %vm354, %v309, 0.0
    %v361 = vadd.f32 %v359, %v360
    %v362 = vsel %vm354, %v310, 0.0
    %v363 = vadd.f32 %v361, %v362
    %v364 = vsel %vm354, %v311, 0.0
    %v365 = vadd.f32 %v363, %v364
    %v366 = vsel %vm354, %v312, 0.0
    %v367 = vadd.f32 %v365, %v366
    %v368 = vsel %vm354, %v313, 0.0
    %v369 = vadd.f32 %v367, %v368
    %v370 = vsel %vm354, %v314, 0.0
    %v371 = vadd.f32 %v369, %v370
    %v372 = vsel %vm354, %v315, 0.0
    %v373 = vadd.f32 %v371, %v372
    %v374 = vsel %vm354, %v316, 0.0
    %v375 = vadd.f32 %v373, %v374
    %v376 = vsel %vm354, %v317, 0.0
    %v377 = vadd.f32 %v375, %v376
    %v378 = vsel %vm354, %v318, 0.0
    %v379 = vadd.f32 %v377, %v378
    %v380 = vsel %vm354, %v319, 0.0
    %v381 = vadd.f32 %v379, %v380
    %v382 = vsel %vm354, %v320, 0.0
    %v383 = vadd.f32 %v381, %v382
    %v384 = vsel %vm354, %v321, 0.0
    %v385 = vadd.f32 %v383, %v384
    %v386 = vsel %vm354, %v322, 0.0
    %v387 = vadd.f32 %v385, %v386
    %v388 = vsel %vm354, %v323, 0.0
    %v389 = vadd.f32 %v387, %v388
    %v390 = vsel %vm354, %v324, 0.0
    %v391 = vadd.f32 %v389, %v390
    %v392 = vsel %vm354, %v325, 0.0
    %v393 = vadd.f32 %v391, %v392
    %v394 = vsel %vm354, %v326, 0.0
    %v395 = vadd.f32 %v393, %v394
    %v396 = vsel %vm354, %v327, 0.0
    %v397 = vadd.f32 %v395, %v396
    %v398 = vsel %vm354, %v328, 0.0
    %v399 = vadd.f32 %v397, %v398
    %v400 = vsel %vm354, %v329, 0.0
    %v401 = vadd.f32 %v399, %v400
    %v402 = vsel %vm354, %v330, 0.0
    %v403 = vadd.f32 %v401, %v402
    %v404 = vsel %vm354, %v331, 0.0
    %v405 = vadd.f32 %v403, %v404
    %v406 = vsel %vm354, %v332, 0.0
    %v407 = vadd.f32 %v405, %v406
    %v408 = vsel %vm354, %v333, 0.0
    %v409 = vadd.f32 %v407, %v408
    %v410 = vsel %vm354, %v334, 0.0
    %v411 = vadd.f32 %v409, %v410
    %v412 = vsel %vm354, %v335, 0.0
    %v413 = vadd.f32 %v411, %v412
    %v414 = vsel %vm354, %v336, 0.0
    %v415 = vadd.f32 %v413, %v414
    %v416 = vsel %vm354, %v337, 0.0
    %v417 = vadd.f32 %v415, %v416
    %v418 = vsel %vm354, %v338, 0.0
    %v419 = vadd.f32 %v417, %v418
    %v420 = vsel %vm354, %v339, 0.0
    %v421 = vadd.f32 %v419, %v420
    %v422 = vsel %vm354, %v340, 0.0
    %v423 = vadd.f32 %v421, %v422
    %v424 = vsel %vm354, %v341, 0.0
    %v425 = vadd.f32 %v423, %v424
    %v426 = vsel %vm354, %v342, 0.0
    %v427 = vadd.f32 %v425, %v426
    %v428 = vsel %vm354, %v343, 0.0
    %v429 = vadd.f32 %v427, %v428
    %v430 = vsel %vm354, %v344, 0.0
    %v431 = vadd.f32 %v429, %v430
    %v432 = vsel %vm354, %v345, 0.0
    %v433 = vadd.f32 %v431, %v432
    %v434 = vsel %vm354, %v346, 0.0
    %v435 = vadd.f32 %v433, %v434
    %v436 = vsel %vm354, %v347, 0.0
    %v437 = vadd.f32 %v435, %v436
    %v438 = vsel %vm354, %v348, 0.0
    %v439 = vadd.f32 %v437, %v438
    %v440 = vsel %vm354, %v349, 0.0
    %v441 = vadd.f32 %v439, %v440
    %v442 = vsel %vm354, %v350, 0.0
    %v443 = vadd.f32 %v441, %v442
    %v444 = vsel %vm354, %v351, 0.0
    %v445 = vadd.f32 %v443, %v444
    %v446 = vsel %vm354, %v352, 0.0
    %v447 = vadd.f32 %v445, %v446
    %v448 = vsel %vm354, %v353, 0.0
    %v449 = vadd.f32 %v447, %v448
    %v450 = vrot.slane %v449, 4
    %v451 = vadd.f32 %v449, %v450
    %v452 = vrot.slane %v451, 2
    %v453 = vadd.f32 %v451, %v452
    %v454 = vrot.slane %v453, 1
    %v455 = vadd.f32 %v453, %v454
    %v456 = vmul.f32 %v162, %v162
    %v457 = vmul.f32 %v163, %v163
    %v458 = vmul.f32 %v164, %v164
    %v459 = vmul.f32 %v165, %v165
    %v460 = vmul.f32 %v166, %v166
    %v461 = vmul.f32 %v167, %v167
    %v462 = vmul.f32 %v168, %v168
    %v463 = vmul.f32 %v169, %v169
    %v464 = vmul.f32 %v170, %v170
    %v465 = vmul.f32 %v171, %v171
    %v466 = vmul.f32 %v172, %v172
    %v467 = vmul.f32 %v173, %v173
    %v468 = vmul.f32 %v174, %v174
    %v469 = vmul.f32 %v175, %v175
    %v470 = vmul.f32 %v176, %v176
    %v471 = vmul.f32 %v177, %v177
    %v472 = vmul.f32 %v178, %v178
    %v473 = vmul.f32 %v179, %v179
    %v474 = vmul.f32 %v180, %v180
    %v475 = vmul.f32 %v181, %v181
    %v476 = vmul.f32 %v182, %v182
    %v477 = vmul.f32 %v183, %v183
    %v478 = vmul.f32 %v184, %v184
    %v479 = vmul.f32 %v185, %v185
    %v480 = vmul.f32 %v186, %v186
    %v481 = vmul.f32 %v187, %v187
    %v482 = vmul.f32 %v188, %v188
    %v483 = vmul.f32 %v189, %v189
    %v484 = vmul.f32 %v190, %v190
    %v485 = vmul.f32 %v191, %v191
    %v486 = vmul.f32 %v192, %v192
    %v487 = vmul.f32 %v193, %v193
    %v488 = vmul.f32 %v194, %v194
    %v489 = vmul.f32 %v195, %v195
    %v490 = vmul.f32 %v196, %v196
    %v491 = vmul.f32 %v197, %v197
    %v492 = vmul.f32 %v198, %v198
    %v493 = vmul.f32 %v199, %v199
    %v494 = vmul.f32 %v200, %v200
    %v495 = vmul.f32 %v201, %v201
    %v496 = vmul.f32 %v202, %v202
    %v497 = vmul.f32 %v203, %v203
    %v498 = vmul.f32 %v204, %v204
    %v499 = vmul.f32 %v205, %v205
    %v500 = vmul.f32 %v206, %v206
    %v501 = vmul.f32 %v207, %v207
    %v502 = vmul.f32 %v208, %v208
    %v503 = vmul.f32 %v209, %v209
    %v504 = vsel %vm354, %v456, 0.0
    %v505 = vsel %vm354, %v457, 0.0
    %v506 = vadd.f32 %v504, %v505
    %v507 = vsel %vm354, %v458, 0.0
    %v508 = vadd.f32 %v506, %v507
    %v509 = vsel %vm354, %v459, 0.0
    %v510 = vadd.f32 %v508, %v509
    %v511 = vsel %vm354, %v460, 0.0
    %v512 = vadd.f32 %v510, %v511
    %v513 = vsel %vm354, %v461, 0.0
    %v514 = vadd.f32 %v512, %v513
    %v515 = vsel %vm354, %v462, 0.0
    %v516 = vadd.f32 %v514, %v515
    %v517 = vsel %vm354, %v463, 0.0
    %v518 = vadd.f32 %v516, %v517
    %v519 = vsel %vm354, %v464, 0.0
    %v520 = vadd.f32 %v518, %v519
    %v521 = vsel %vm354, %v465, 0.0
    %v522 = vadd.f32 %v520, %v521
    %v523 = vsel %vm354, %v466, 0.0
    %v524 = vadd.f32 %v522, %v523
    %v525 = vsel %vm354, %v467, 0.0
    %v526 = vadd.f32 %v524, %v525
    %v527 = vsel %vm354, %v468, 0.0
    %v528 = vadd.f32 %v526, %v527
    %v529 = vsel %vm354, %v469, 0.0
    %v530 = vadd.f32 %v528, %v529
    %v531 = vsel %vm354, %v470, 0.0
    %v532 = vadd.f32 %v530, %v531
    %v533 = vsel %vm354, %v471, 0.0
    %v534 = vadd.f32 %v532, %v533
    %v535 = vsel %vm354, %v472, 0.0
    %v536 = vadd.f32 %v534, %v535
    %v537 = vsel %vm354, %v473, 0.0
    %v538 = vadd.f32 %v536, %v537
    %v539 = vsel %vm354, %v474, 0.0
    %v540 = vadd.f32 %v538, %v539
    %v541 = vsel %vm354, %v475, 0.0
    %v542 = vadd.f32 %v540, %v541
    %v543 = vsel %vm354, %v476, 0.0
    %v544 = vadd.f32 %v542, %v543
    %v545 = vsel %vm354, %v477, 0.0
    %v546 = vadd.f32 %v544, %v545
    %v547 = vsel %vm354, %v478, 0.0
    %v548 = vadd.f32 %v546, %v547
    %v549 = vsel %vm354, %v479, 0.0
    %v550 = vadd.f32 %v548, %v549
    %v551 = vsel %vm354, %v480, 0.0
    %v552 = vadd.f32 %v550, %v551
    %v553 = vsel %vm354, %v481, 0.0
    %v554 = vadd.f32 %v552, %v553
    %v555 = vsel %vm354, %v482, 0.0
    %v556 = vadd.f32 %v554, %v555
    %v557 = vsel %vm354, %v483, 0.0
    %v558 = vadd.f32 %v556, %v557
    %v559 = vsel %vm354, %v484, 0.0
    %v560 = vadd.f32 %v558, %v559
    %v561 = vsel %vm354, %v485, 0.0
    %v562 = vadd.f32 %v560, %v561
    %v563 = vsel %vm354, %v486, 0.0
    %v564 = vadd.f32 %v562, %v563
    %v565 = vsel %vm354, %v487, 0.0
    %v566 = vadd.f32 %v564, %v565
    %v567 = vsel %vm354, %v488, 0.0
    %v568 = vadd.f32 %v566, %v567
    %v569 = vsel %vm354, %v489, 0.0
    %v570 = vadd.f32 %v568, %v569
    %v571 = vsel %vm354, %v490, 0.0
    %v572 = vadd.f32 %v570, %v571
    %v573 = vsel %vm354, %v491, 0.0
    %v574 = vadd.f32 %v572, %v573
    %v575 = vsel %vm354, %v492, 0.0
    %v576 = vadd.f32 %v574, %v575
    %v577 = vsel %vm354, %v493, 0.0
    %v578 = vadd.f32 %v576, %v577
    %v579 = vsel %vm354, %v494, 0.0
    %v580 = vadd.f32 %v578, %v579
    %v581 = vsel %vm354, %v495, 0.0
    %v582 = vadd.f32 %v580, %v581
    %v583 = vsel %vm354, %v496, 0.0
    %v584 = vadd.f32 %v582, %v583
    %v585 = vsel %vm354, %v497, 0.0
    %v586 = vadd.f32 %v584, %v585
    %v587 = vsel %vm354, %v498, 0.0
    %v588 = vadd.f32 %v586, %v587
    %v589 = vsel %vm354, %v499, 0.0
    %v590 = vadd.f32 %v588, %v589
    %v591 = vsel %vm354, %v500, 0.0
    %v592 = vadd.f32 %v590, %v591
    %v593 = vsel %vm354, %v501, 0.0
    %v594 = vadd.f32 %v592, %v593
    %v595 = vsel %vm354, %v502, 0.0
    %v596 = vadd.f32 %v594, %v595
    %v597 = vsel %vm354, %v503, 0.0
    %v598 = vadd.f32 %v596, %v597
    %v599 = vrot.slane %v598, 4
    %v600 = vadd.f32 %v598, %v599
    %v601 = vrot.slane %v600, 2
    %v602 = vadd.f32 %v600, %v601
    %v603 = vrot.slane %v602, 1
    %v604 = vadd.f32 %v602, %v603
    %v605 = vmul.f32 %v258, %v258
    %v606 = vmul.f32 %v259, %v259
    %v607 = vmul.f32 %v260, %v260
    %v608 = vmul.f32 %v261, %v261
    %v609 = vmul.f32 %v262, %v262
    %v610 = vmul.f32 %v263, %v263
    %v611 = vmul.f32 %v264, %v264
    %v612 = vmul.f32 %v265, %v265
    %v613 = vmul.f32 %v266, %v266
    %v614 = vmul.f32 %v267, %v267
    %v615 = vmul.f32 %v268, %v268
    %v616 = vmul.f32 %v269, %v269
    %v617 = vmul.f32 %v270, %v270
    %v618 = vmul.f32 %v271, %v271
    %v619 = vmul.f32 %v272, %v272
    %v620 = vmul.f32 %v273, %v273
    %v621 = vmul.f32 %v274, %v274
    %v622 = vmul.f32 %v275, %v275
    %v623 = vmul.f32 %v276, %v276
    %v624 = vmul.f32 %v277, %v277
    %v625 = vmul.f32 %v278, %v278
    %v626 = vmul.f32 %v279, %v279
    %v627 = vmul.f32 %v280, %v280
    %v628 = vmul.f32 %v281, %v281
    %v629 = vmul.f32 %v282, %v282
    %v630 = vmul.f32 %v283, %v283
    %v631 = vmul.f32 %v284, %v284
    %v632 = vmul.f32 %v285, %v285
    %v633 = vmul.f32 %v286, %v286
    %v634 = vmul.f32 %v287, %v287
    %v635 = vmul.f32 %v288, %v288
    %v636 = vmul.f32 %v289, %v289
    %v637 = vmul.f32 %v290, %v290
    %v638 = vmul.f32 %v291, %v291
    %v639 = vmul.f32 %v292, %v292
    %v640 = vmul.f32 %v293, %v293
    %v641 = vmul.f32 %v294, %v294
    %v642 = vmul.f32 %v295, %v295
    %v643 = vmul.f32 %v296, %v296
    %v644 = vmul.f32 %v297, %v297
    %v645 = vmul.f32 %v298, %v298
    %v646 = vmul.f32 %v299, %v299
    %v647 = vmul.f32 %v300, %v300
    %v648 = vmul.f32 %v301, %v301
    %v649 = vmul.f32 %v302, %v302
    %v650 = vmul.f32 %v303, %v303
    %v651 = vmul.f32 %v304, %v304
    %v652 = vmul.f32 %v305, %v305
    %v653 = vsel %vm354, %v605, 0.0
    %v654 = vsel %vm354, %v606, 0.0
    %v655 = vadd.f32 %v653, %v654
    %v656 = vsel %vm354, %v607, 0.0
    %v657 = vadd.f32 %v655, %v656
    %v658 = vsel %vm354, %v608, 0.0
    %v659 = vadd.f32 %v657, %v658
    %v660 = vsel %vm354, %v609, 0.0
    %v661 = vadd.f32 %v659, %v660
    %v662 = vsel %vm354, %v610, 0.0
    %v663 = vadd.f32 %v661, %v662
    %v664 = vsel %vm354, %v611, 0.0
    %v665 = vadd.f32 %v663, %v664
    %v666 = vsel %vm354, %v612, 0.0
    %v667 = vadd.f32 %v665, %v666
    %v668 = vsel %vm354, %v613, 0.0
    %v669 = vadd.f32 %v667, %v668
    %v670 = vsel %vm354, %v614, 0.0
    %v671 = vadd.f32 %v669, %v670
    %v672 = vsel %vm354, %v615, 0.0
    %v673 = vadd.f32 %v671, %v672
    %v674 = vsel %vm354, %v616, 0.0
    %v675 = vadd.f32 %v673, %v674
    %v676 = vsel %vm354, %v617, 0.0
    %v677 = vadd.f32 %v675, %v676
    %v678 = vsel %vm354, %v618, 0.0
    %v679 = vadd.f32 %v677, %v678
    %v680 = vsel %vm354, %v619, 0.0
    %v681 = vadd.f32 %v679, %v680
    %v682 = vsel %vm354, %v620, 0.0
    %v683 = vadd.f32 %v681, %v682
    %v684 = vsel %vm354, %v621, 0.0
    %v685 = vadd.f32 %v683, %v684
    %v686 = vsel %vm354, %v622, 0.0
    %v687 = vadd.f32 %v685, %v686
    %v688 = vsel %vm354, %v623, 0.0
    %v689 = vadd.f32 %v687, %v688
    %v690 = vsel %vm354, %v624, 0.0
    %v691 = vadd.f32 %v689, %v690
    %v692 = vsel %vm354, %v625, 0.0
    %v693 = vadd.f32 %v691, %v692
    %v694 = vsel %vm354, %v626, 0.0
    %v695 = vadd.f32 %v693, %v694
    %v696 = vsel %vm354, %v627, 0.0
    %v697 = vadd.f32 %v695, %v696
    %v698 = vsel %vm354, %v628, 0.0
    %v699 = vadd.f32 %v697, %v698
    %v700 = vsel %vm354, %v629, 0.0
    %v701 = vadd.f32 %v699, %v700
    %v702 = vsel %vm354, %v630, 0.0
    %v703 = vadd.f32 %v701, %v702
    %v704 = vsel %vm354, %v631, 0.0
    %v705 = vadd.f32 %v703, %v704
    %v706 = vsel %vm354, %v632, 0.0
    %v707 = vadd.f32 %v705, %v706
    %v708 = vsel %vm354, %v633, 0.0
    %v709 = vadd.f32 %v707, %v708
    %v710 = vsel %vm354, %v634, 0.0
    %v711 = vadd.f32 %v709, %v710
    %v712 = vsel %vm354, %v635, 0.0
    %v713 = vadd.f32 %v711, %v712
    %v714 = vsel %vm354, %v636, 0.0
    %v715 = vadd.f32 %v713, %v714
    %v716 = vsel %vm354, %v637, 0.0
    %v717 = vadd.f32 %v715, %v716
    %v718 = vsel %vm354, %v638, 0.0
    %v719 = vadd.f32 %v717, %v718
    %v720 = vsel %vm354, %v639, 0.0
    %v721 = vadd.f32 %v719, %v720
    %v722 = vsel %vm354, %v640, 0.0
    %v723 = vadd.f32 %v721, %v722
    %v724 = vsel %vm354, %v641, 0.0
    %v725 = vadd.f32 %v723, %v724
    %v726 = vsel %vm354, %v642, 0.0
    %v727 = vadd.f32 %v725, %v726
    %v728 = vsel %vm354, %v643, 0.0
    %v729 = vadd.f32 %v727, %v728
    %v730 = vsel %vm354, %v644, 0.0
    %v731 = vadd.f32 %v729, %v730
    %v732 = vsel %vm354, %v645, 0.0
    %v733 = vadd.f32 %v731, %v732
    %v734 = vsel %vm354, %v646, 0.0
    %v735 = vadd.f32 %v733, %v734
    %v736 = vsel %vm354, %v647, 0.0
    %v737 = vadd.f32 %v735, %v736
    %v738 = vsel %vm354, %v648, 0.0
    %v739 = vadd.f32 %v737, %v738
    %v740 = vsel %vm354, %v649, 0.0
    %v741 = vadd.f32 %v739, %v740
    %v742 = vsel %vm354, %v650, 0.0
    %v743 = vadd.f32 %v741, %v742
    %v744 = vsel %vm354, %v651, 0.0
    %v745 = vadd.f32 %v743, %v744
    %v746 = vsel %vm354, %v652, 0.0
    %v747 = vadd.f32 %v745, %v746
    %v748 = vrot.slane %v747, 4
    %v749 = vadd.f32 %v747, %v748
    %v750 = vrot.slane %v749, 2
    %v751 = vadd.f32 %v749, %v750
    %v752 = vrot.slane %v751, 1
    %v753 = vadd.f32 %v751, %v752
    %v754 = vmul.f32 %v66, %v258
    %v755 = vmul.f32 %v67, %v259
    %v756 = vmul.f32 %v68, %v260
    %v757 = vmul.f32 %v69, %v261
    %v758 = vmul.f32 %v70, %v262
    %v759 = vmul.f32 %v71, %v263
    %v760 = vmul.f32 %v72, %v264
    %v761 = vmul.f32 %v73, %v265
    %v762 = vmul.f32 %v74, %v266
    %v763 = vmul.f32 %v75, %v267
    %v764 = vmul.f32 %v76, %v268
    %v765 = vmul.f32 %v77, %v269
    %v766 = vmul.f32 %v78, %v270
    %v767 = vmul.f32 %v79, %v271
    %v768 = vmul.f32 %v80, %v272
    %v769 = vmul.f32 %v81, %v273
    %v770 = vmul.f32 %v82, %v274
    %v771 = vmul.f32 %v83, %v275
    %v772 = vmul.f32 %v84, %v276
    %v773 = vmul.f32 %v85, %v277
    %v774 = vmul.f32 %v86, %v278
    %v775 = vmul.f32 %v87, %v279
    %v776 = vmul.f32 %v88, %v280
    %v777 = vmul.f32 %v89, %v281
    %v778 = vmul.f32 %v90, %v282
    %v779 = vmul.f32 %v91, %v283
    %v780 = vmul.f32 %v92, %v284
    %v781 = vmul.f32 %v93, %v285
    %v782 = vmul.f32 %v94, %v286
    %v783 = vmul.f32 %v95, %v287
    %v784 = vmul.f32 %v96, %v288
    %v785 = vmul.f32 %v97, %v289
    %v786 = vmul.f32 %v98, %v290
    %v787 = vmul.f32 %v99, %v291
    %v788 = vmul.f32 %v100, %v292
    %v789 = vmul.f32 %v101, %v293
    %v790 = vmul.f32 %v102, %v294
    %v791 = vmul.f32 %v103, %v295
    %v792 = vmul.f32 %v104, %v296
    %v793 = vmul.f32 %v105, %v297
    %v794 = vmul.f32 %v106, %v298
    %v795 = vmul.f32 %v107, %v299
    %v796 = vmul.f32 %v108, %v300
    %v797 = vmul.f32 %v109, %v301
    %v798 = vmul.f32 %v110, %v302
    %v799 = vmul.f32 %v111, %v303
    %v800 = vmul.f32 %v112, %v304
    %v801 = vmul.f32 %v113, %v305
    %v802 = vsel %vm354, %v754, 0.0
    %v803 = vsel %vm354, %v755, 0.0
    %v804 = vadd.f32 %v802, %v803
    %v805 = vsel %vm354, %v756, 0.0
    %v806 = vadd.f32 %v804, %v805
    %v807 = vsel %vm354, %v757, 0.0
    %v808 = vadd.f32 %v806, %v807
    %v809 = vsel %vm354, %v758, 0.0
    %v810 = vadd.f32 %v808, %v809
    %v811 = vsel %vm354, %v759, 0.0
    %v812 = vadd.f32 %v810, %v811
    %v813 = vsel %vm354, %v760, 0.0
    %v814 = vadd.f32 %v812, %v813
    %v815 = vsel %vm354, %v761, 0.0
    %v816 = vadd.f32 %v814, %v815
    %v817 = vsel %vm354, %v762, 0.0
    %v818 = vadd.f32 %v816, %v817
    %v819 = vsel %vm354, %v763, 0.0
    %v820 = vadd.f32 %v818, %v819
    %v821 = vsel %vm354, %v764, 0.0
    %v822 = vadd.f32 %v820, %v821
    %v823 = vsel %vm354, %v765, 0.0
    %v824 = vadd.f32 %v822, %v823
    %v825 = vsel %vm354, %v766, 0.0
    %v826 = vadd.f32 %v824, %v825
    %v827 = vsel %vm354, %v767, 0.0
    %v828 = vadd.f32 %v826, %v827
    %v829 = vsel %vm354, %v768, 0.0
    %v830 = vadd.f32 %v828, %v829
    %v831 = vsel %vm354, %v769, 0.0
    %v832 = vadd.f32 %v830, %v831
    %v833 = vsel %vm354, %v770, 0.0
    %v834 = vadd.f32 %v832, %v833
    %v835 = vsel %vm354, %v771, 0.0
    %v836 = vadd.f32 %v834, %v835
    %v837 = vsel %vm354, %v772, 0.0
    %v838 = vadd.f32 %v836, %v837
    %v839 = vsel %vm354, %v773, 0.0
    %v840 = vadd.f32 %v838, %v839
    %v841 = vsel %vm354, %v774, 0.0
    %v842 = vadd.f32 %v840, %v841
    %v843 = vsel %vm354, %v775, 0.0
    %v844 = vadd.f32 %v842, %v843
    %v845 = vsel %vm354, %v776, 0.0
    %v846 = vadd.f32 %v844, %v845
    %v847 = vsel %vm354, %v777, 0.0
    %v848 = vadd.f32 %v846, %v847
    %v849 = vsel %vm354, %v778, 0.0
    %v850 = vadd.f32 %v848, %v849
    %v851 = vsel %vm354, %v779, 0.0
    %v852 = vadd.f32 %v850, %v851
    %v853 = vsel %vm354, %v780, 0.0
    %v854 = vadd.f32 %v852, %v853
    %v855 = vsel %vm354, %v781, 0.0
    %v856 = vadd.f32 %v854, %v855
    %v857 = vsel %vm354, %v782, 0.0
    %v858 = vadd.f32 %v856, %v857
    %v859 = vsel %vm354, %v783, 0.0
    %v860 = vadd.f32 %v858, %v859
    %v861 = vsel %vm354, %v784, 0.0
    %v862 = vadd.f32 %v860, %v861
    %v863 = vsel %vm354, %v785, 0.0
    %v864 = vadd.f32 %v862, %v863
    %v865 = vsel %vm354, %v786, 0.0
    %v866 = vadd.f32 %v864, %v865
    %v867 = vsel %vm354, %v787, 0.0
    %v868 = vadd.f32 %v866, %v867
    %v869 = vsel %vm354, %v788, 0.0
    %v870 = vadd.f32 %v868, %v869
    %v871 = vsel %vm354, %v789, 0.0
    %v872 = vadd.f32 %v870, %v871
    %v873 = vsel %vm354, %v790, 0.0
    %v874 = vadd.f32 %v872, %v873
    %v875 = vsel %vm354, %v791, 0.0
    %v876 = vadd.f32 %v874, %v875
    %v877 = vsel %vm354, %v792, 0.0
    %v878 = vadd.f32 %v876, %v877
    %v879 = vsel %vm354, %v793, 0.0
    %v880 = vadd.f32 %v878, %v879
    %v881 = vsel %vm354, %v794, 0.0
    %v882 = vadd.f32 %v880, %v881
    %v883 = vsel %vm354, %v795, 0.0
    %v884 = vadd.f32 %v882, %v883
    %v885 = vsel %vm354, %v796, 0.0
    %v886 = vadd.f32 %v884, %v885
    %v887 = vsel %vm354, %v797, 0.0
    %v888 = vadd.f32 %v886, %v887
    %v889 = vsel %vm354, %v798, 0.0
    %v890 = vadd.f32 %v888, %v889
    %v891 = vsel %vm354, %v799, 0.0
    %v892 = vadd.f32 %v890, %v891
    %v893 = vsel %vm354, %v800, 0.0
    %v894 = vadd.f32 %v892, %v893
    %v895 = vsel %vm354, %v801, 0.0
    %v896 = vadd.f32 %v894, %v895
    %v897 = vrot.slane %v896, 4
    %v898 = vadd.f32 %v896, %v897
    %v899 = vrot.slane %v898, 2
    %v900 = vadd.f32 %v898, %v899
    %v901 = vrot.slane %v900, 1
    %v902 = vadd.f32 %v900, %v901
    %v903 = vmul.f32 %v455, %v753
    %v904 = vmax.f32 %v903, 1e-16
    %v905 = vrsqrt.pop %v904
    %v906 = vmul.f32 %v902, %v905
    %v907 = vmul.f32 %v66, %v162
    %v908 = vmul.f32 %v67, %v163
    %v909 = vmul.f32 %v68, %v164
    %v910 = vmul.f32 %v69, %v165
    %v911 = vmul.f32 %v70, %v166
    %v912 = vmul.f32 %v71, %v167
    %v913 = vmul.f32 %v72, %v168
    %v914 = vmul.f32 %v73, %v169
    %v915 = vmul.f32 %v74, %v170
    %v916 = vmul.f32 %v75, %v171
    %v917 = vmul.f32 %v76, %v172
    %v918 = vmul.f32 %v77, %v173
    %v919 = vmul.f32 %v78, %v174
    %v920 = vmul.f32 %v79, %v175
    %v921 = vmul.f32 %v80, %v176
    %v922 = vmul.f32 %v81, %v177
    %v923 = vmul.f32 %v82, %v178
    %v924 = vmul.f32 %v83, %v179
    %v925 = vmul.f32 %v84, %v180
    %v926 = vmul.f32 %v85, %v181
    %v927 = vmul.f32 %v86, %v182
    %v928 = vmul.f32 %v87, %v183
    %v929 = vmul.f32 %v88, %v184
    %v930 = vmul.f32 %v89, %v185
    %v931 = vmul.f32 %v90, %v186
    %v932 = vmul.f32 %v91, %v187
    %v933 = vmul.f32 %v92, %v188
    %v934 = vmul.f32 %v93, %v189
    %v935 = vmul.f32 %v94, %v190
    %v936 = vmul.f32 %v95, %v191
    %v937 = vmul.f32 %v96, %v192
    %v938 = vmul.f32 %v97, %v193
    %v939 = vmul.f32 %v98, %v194
    %v940 = vmul.f32 %v99, %v195
    %v941 = vmul.f32 %v100, %v196
    %v942 = vmul.f32 %v101, %v197
    %v943 = vmul.f32 %v102, %v198
    %v944 = vmul.f32 %v103, %v199
    %v945 = vmul.f32 %v104, %v200
    %v946 = vmul.f32 %v105, %v201
    %v947 = vmul.f32 %v106, %v202
    %v948 = vmul.f32 %v107, %v203
    %v949 = vmul.f32 %v108, %v204
    %v950 = vmul.f32 %v109, %v205
    %v951 = vmul.f32 %v110, %v206
    %v952 = vmul.f32 %v111, %v207
    %v953 = vmul.f32 %v112, %v208
    %v954 = vmul.f32 %v113, %v209
    %v955 = vsel %vm354, %v907, 0.0
    %v956 = vsel %vm354, %v908, 0.0
    %v957 = vadd.f32 %v955, %v956
    %v958 = vsel %vm354, %v909, 0.0
    %v959 = vadd.f32 %v957, %v958
    %v960 = vsel %vm354, %v910, 0.0
    %v961 = vadd.f32 %v959, %v960
    %v962 = vsel %vm354, %v911, 0.0
    %v963 = vadd.f32 %v961, %v962
    %v964 = vsel %vm354, %v912, 0.0
    %v965 = vadd.f32 %v963, %v964
    %v966 = vsel %vm354, %v913, 0.0
    %v967 = vadd.f32 %v965, %v966
    %v968 = vsel %vm354, %v914, 0.0
    %v969 = vadd.f32 %v967, %v968
    %v970 = vsel %vm354, %v915, 0.0
    %v971 = vadd.f32 %v969, %v970
    %v972 = vsel %vm354, %v916, 0.0
    %v973 = vadd.f32 %v971, %v972
    %v974 = vsel %vm354, %v917, 0.0
    %v975 = vadd.f32 %v973, %v974
    %v976 = vsel %vm354, %v918, 0.0
    %v977 = vadd.f32 %v975, %v976
    %v978 = vsel %vm354, %v919, 0.0
    %v979 = vadd.f32 %v977, %v978
    %v980 = vsel %vm354, %v920, 0.0
    %v981 = vadd.f32 %v979, %v980
    %v982 = vsel %vm354, %v921, 0.0
    %v983 = vadd.f32 %v981, %v982
    %v984 = vsel %vm354, %v922, 0.0
    %v985 = vadd.f32 %v983, %v984
    %v986 = vsel %vm354, %v923, 0.0
    %v987 = vadd.f32 %v985, %v986
    %v988 = vsel %vm354, %v924, 0.0
    %v989 = vadd.f32 %v987, %v988
    %v990 = vsel %vm354, %v925, 0.0
    %v991 = vadd.f32 %v989, %v990
    %v992 = vsel %vm354, %v926, 0.0
    %v993 = vadd.f32 %v991, %v992
    %v994 = vsel %vm354, %v927, 0.0
    %v995 = vadd.f32 %v993, %v994
    %v996 = vsel %vm354, %v928, 0.0
    %v997 = vadd.f32 %v995, %v996
    %v998 = vsel %vm354, %v929, 0.0
    %v999 = vadd.f32 %v997, %v998
    %v1000 = vsel %vm354, %v930, 0.0
    %v1001 = vadd.f32 %v999, %v1000
    %v1002 = vsel %vm354, %v931, 0.0
    %v1003 = vadd.f32 %v1001, %v1002
    %v1004 = vsel %vm354, %v932, 0.0
    %v1005 = vadd.f32 %v1003, %v1004
    %v1006 = vsel %vm354, %v933, 0.0
    %v1007 = vadd.f32 %v1005, %v1006
    %v1008 = vsel %vm354, %v934, 0.0
    %v1009 = vadd.f32 %v1007, %v1008
    %v1010 = vsel %vm354, %v935, 0.0
    %v1011 = vadd.f32 %v1009, %v1010
    %v1012 = vsel %vm354, %v936, 0.0
    %v1013 = vadd.f32 %v1011, %v1012
    %v1014 = vsel %vm354, %v937, 0.0
    %v1015 = vadd.f32 %v1013, %v1014
    %v1016 = vsel %vm354, %v938, 0.0
    %v1017 = vadd.f32 %v1015, %v1016
    %v1018 = vsel %vm354, %v939, 0.0
    %v1019 = vadd.f32 %v1017, %v1018
    %v1020 = vsel %vm354, %v940, 0.0
    %v1021 = vadd.f32 %v1019, %v1020
    %v1022 = vsel %vm354, %v941, 0.0
    %v1023 = vadd.f32 %v1021, %v1022
    %v1024 = vsel %vm354, %v942, 0.0
    %v1025 = vadd.f32 %v1023, %v1024
    %v1026 = vsel %vm354, %v943, 0.0
    %v1027 = vadd.f32 %v1025, %v1026
    %v1028 = vsel %vm354, %v944, 0.0
    %v1029 = vadd.f32 %v1027, %v1028
    %v1030 = vsel %vm354, %v945, 0.0
    %v1031 = vadd.f32 %v1029, %v1030
    %v1032 = vsel %vm354, %v946, 0.0
    %v1033 = vadd.f32 %v1031, %v1032
    %v1034 = vsel %vm354, %v947, 0.0
    %v1035 = vadd.f32 %v1033, %v1034
    %v1036 = vsel %vm354, %v948, 0.0
    %v1037 = vadd.f32 %v1035, %v1036
    %v1038 = vsel %vm354, %v949, 0.0
    %v1039 = vadd.f32 %v1037, %v1038
    %v1040 = vsel %vm354, %v950, 0.0
    %v1041 = vadd.f32 %v1039, %v1040
    %v1042 = vsel %vm354, %v951, 0.0
    %v1043 = vadd.f32 %v1041, %v1042
    %v1044 = vsel %vm354, %v952, 0.0
    %v1045 = vadd.f32 %v1043, %v1044
    %v1046 = vsel %vm354, %v953, 0.0
    %v1047 = vadd.f32 %v1045, %v1046
    %v1048 = vsel %vm354, %v954, 0.0
    %v1049 = vadd.f32 %v1047, %v1048
    %v1050 = vrot.slane %v1049, 4
    %v1051 = vadd.f32 %v1049, %v1050
    %v1052 = vrot.slane %v1051, 2
    %v1053 = vadd.f32 %v1051, %v1052
    %v1054 = vrot.slane %v1053, 1
    %v1055 = vadd.f32 %v1053, %v1054
    %v1056 = vmul.f32 %v455, %v604
    %v1057 = vmax.f32 %v1056, 1e-16
    %v1058 = vrsqrt.pop %v1057
    %v1059 = vmul.f32 %v1055, %v1058
    %v1060 = vmul.f32 %v162, %v258
    %v1061 = vmul.f32 %v163, %v259
    %v1062 = vmul.f32 %v164, %v260
    %v1063 = vmul.f32 %v165, %v261
    %v1064 = vmul.f32 %v166, %v262
    %v1065 = vmul.f32 %v167, %v263
    %v1066 = vmul.f32 %v168, %v264
    %v1067 = vmul.f32 %v169, %v265
    %v1068 = vmul.f32 %v170, %v266
    %v1069 = vmul.f32 %v171, %v267
    %v1070 = vmul.f32 %v172, %v268
    %v1071 = vmul.f32 %v173, %v269
    %v1072 = vmul.f32 %v174, %v270
    %v1073 = vmul.f32 %v175, %v271
    %v1074 = vmul.f32 %v176, %v272
    %v1075 = vmul.f32 %v177, %v273
    %v1076 = vmul.f32 %v178, %v274
    %v1077 = vmul.f32 %v179, %v275
    %v1078 = vmul.f32 %v180, %v276
    %v1079 = vmul.f32 %v181, %v277
    %v1080 = vmul.f32 %v182, %v278
    %v1081 = vmul.f32 %v183, %v279
    %v1082 = vmul.f32 %v184, %v280
    %v1083 = vmul.f32 %v185, %v281
    %v1084 = vmul.f32 %v186, %v282
    %v1085 = vmul.f32 %v187, %v283
    %v1086 = vmul.f32 %v188, %v284
    %v1087 = vmul.f32 %v189, %v285
    %v1088 = vmul.f32 %v190, %v286
    %v1089 = vmul.f32 %v191, %v287
    %v1090 = vmul.f32 %v192, %v288
    %v1091 = vmul.f32 %v193, %v289
    %v1092 = vmul.f32 %v194, %v290
    %v1093 = vmul.f32 %v195, %v291
    %v1094 = vmul.f32 %v196, %v292
    %v1095 = vmul.f32 %v197, %v293
    %v1096 = vmul.f32 %v198, %v294
    %v1097 = vmul.f32 %v199, %v295
    %v1098 = vmul.f32 %v200, %v296
    %v1099 = vmul.f32 %v201, %v297
    %v1100 = vmul.f32 %v202, %v298
    %v1101 = vmul.f32 %v203, %v299
    %v1102 = vmul.f32 %v204, %v300
    %v1103 = vmul.f32 %v205, %v301
    %v1104 = vmul.f32 %v206, %v302
    %v1105 = vmul.f32 %v207, %v303
    %v1106 = vmul.f32 %v208, %v304
    %v1107 = vmul.f32 %v209, %v305
    %v1108 = vsel %vm354, %v1060, 0.0
    %v1109 = vsel %vm354, %v1061, 0.0
    %v1110 = vadd.f32 %v1108, %v1109
    %v1111 = vsel %vm354, %v1062, 0.0
    %v1112 = vadd.f32 %v1110, %v1111
    %v1113 = vsel %vm354, %v1063, 0.0
    %v1114 = vadd.f32 %v1112, %v1113
    %v1115 = vsel %vm354, %v1064, 0.0
    %v1116 = vadd.f32 %v1114, %v1115
    %v1117 = vsel %vm354, %v1065, 0.0
    %v1118 = vadd.f32 %v1116, %v1117
    %v1119 = vsel %vm354, %v1066, 0.0
    %v1120 = vadd.f32 %v1118, %v1119
    %v1121 = vsel %vm354, %v1067, 0.0
    %v1122 = vadd.f32 %v1120, %v1121
    %v1123 = vsel %vm354, %v1068, 0.0
    %v1124 = vadd.f32 %v1122, %v1123
    %v1125 = vsel %vm354, %v1069, 0.0
    %v1126 = vadd.f32 %v1124, %v1125
    %v1127 = vsel %vm354, %v1070, 0.0
    %v1128 = vadd.f32 %v1126, %v1127
    %v1129 = vsel %vm354, %v1071, 0.0
    %v1130 = vadd.f32 %v1128, %v1129
    %v1131 = vsel %vm354, %v1072, 0.0
    %v1132 = vadd.f32 %v1130, %v1131
    %v1133 = vsel %vm354, %v1073, 0.0
    %v1134 = vadd.f32 %v1132, %v1133
    %v1135 = vsel %vm354, %v1074, 0.0
    %v1136 = vadd.f32 %v1134, %v1135
    %v1137 = vsel %vm354, %v1075, 0.0
    %v1138 = vadd.f32 %v1136, %v1137
    %v1139 = vsel %vm354, %v1076, 0.0
    %v1140 = vadd.f32 %v1138, %v1139
    %v1141 = vsel %vm354, %v1077, 0.0
    %v1142 = vadd.f32 %v1140, %v1141
    %v1143 = vsel %vm354, %v1078, 0.0
    %v1144 = vadd.f32 %v1142, %v1143
    %v1145 = vsel %vm354, %v1079, 0.0
    %v1146 = vadd.f32 %v1144, %v1145
    %v1147 = vsel %vm354, %v1080, 0.0
    %v1148 = vadd.f32 %v1146, %v1147
    %v1149 = vsel %vm354, %v1081, 0.0
    %v1150 = vadd.f32 %v1148, %v1149
    %v1151 = vsel %vm354, %v1082, 0.0
    %v1152 = vadd.f32 %v1150, %v1151
    %v1153 = vsel %vm354, %v1083, 0.0
    %v1154 = vadd.f32 %v1152, %v1153
    %v1155 = vsel %vm354, %v1084, 0.0
    %v1156 = vadd.f32 %v1154, %v1155
    %v1157 = vsel %vm354, %v1085, 0.0
    %v1158 = vadd.f32 %v1156, %v1157
    %v1159 = vsel %vm354, %v1086, 0.0
    %v1160 = vadd.f32 %v1158, %v1159
    %v1161 = vsel %vm354, %v1087, 0.0
    %v1162 = vadd.f32 %v1160, %v1161
    %v1163 = vsel %vm354, %v1088, 0.0
    %v1164 = vadd.f32 %v1162, %v1163
    %v1165 = vsel %vm354, %v1089, 0.0
    %v1166 = vadd.f32 %v1164, %v1165
    %v1167 = vsel %vm354, %v1090, 0.0
    %v1168 = vadd.f32 %v1166, %v1167
    %v1169 = vsel %vm354, %v1091, 0.0
    %v1170 = vadd.f32 %v1168, %v1169
    %v1171 = vsel %vm354, %v1092, 0.0
    %v1172 = vadd.f32 %v1170, %v1171
    %v1173 = vsel %vm354, %v1093, 0.0
    %v1174 = vadd.f32 %v1172, %v1173
    %v1175 = vsel %vm354, %v1094, 0.0
    %v1176 = vadd.f32 %v1174, %v1175
    %v1177 = vsel %vm354, %v1095, 0.0
    %v1178 = vadd.f32 %v1176, %v1177
    %v1179 = vsel %vm354, %v1096, 0.0
    %v1180 = vadd.f32 %v1178, %v1179
    %v1181 = vsel %vm354, %v1097, 0.0
    %v1182 = vadd.f32 %v1180, %v1181
    %v1183 = vsel %vm354, %v1098, 0.0
    %v1184 = vadd.f32 %v1182, %v1183
    %v1185 = vsel %vm354, %v1099, 0.0
    %v1186 = vadd.f32 %v1184, %v1185
    %v1187 = vsel %vm354, %v1100, 0.0
    %v1188 = vadd.f32 %v1186, %v1187
    %v1189 = vsel %vm354, %v1101, 0.0
    %v1190 = vadd.f32 %v1188, %v1189
    %v1191 = vsel %vm354, %v1102, 0.0
    %v1192 = vadd.f32 %v1190, %v1191
    %v1193 = vsel %vm354, %v1103, 0.0
    %v1194 = vadd.f32 %v1192, %v1193
    %v1195 = vsel %vm354, %v1104, 0.0
    %v1196 = vadd.f32 %v1194, %v1195
    %v1197 = vsel %vm354, %v1105, 0.0
    %v1198 = vadd.f32 %v1196, %v1197
    %v1199 = vsel %vm354, %v1106, 0.0
    %v1200 = vadd.f32 %v1198, %v1199
    %v1201 = vsel %vm354, %v1107, 0.0
    %v1202 = vadd.f32 %v1200, %v1201
    %v1203 = vrot.slane %v1202, 4
    %v1204 = vadd.f32 %v1202, %v1203
    %v1205 = vrot.slane %v1204, 2
    %v1206 = vadd.f32 %v1204, %v1205
    %v1207 = vrot.slane %v1206, 1
    %v1208 = vadd.f32 %v1206, %v1207
    %v1209 = vmul.f32 %v604, %v753
    %v1210 = vmax.f32 %v1209, 1e-16
    %v1211 = vrsqrt.pop %v1210
    %v1212 = vmul.f32 %v1208, %v1211
    %v1213 = vld [vmem:[%s3] sm:$0xf]
    %v1214 = vld [vmem:[%s3 + $0x4] sm:$0xf]
    %v1215 = vld [vmem:[%s3 + $0x8] sm:$0xf]
    %v1216 = vld [vmem:[%s3 + $0xc] sm:$0xf]
    %v1217 = vld [vmem:[%s3 + $0x10] sm:$0xf]
    %v1218 = vld [vmem:[%s3 + $0x14] sm:$0xf]
    %v1219 = vld [vmem:[%s3 + $0x18] sm:$0xf]
    %v1220 = vld [vmem:[%s3 + $0x1c] sm:$0xf]
    %v1221 = vld [vmem:[%s3 + $0x20] sm:$0xf]
    %v1222 = vld [vmem:[%s3 + $0x24] sm:$0xf]
    %v1223 = vld [vmem:[%s3 + $0x28] sm:$0xf]
    %v1224 = vld [vmem:[%s3 + $0x2c] sm:$0xf]
    %v1225 = vld [vmem:[%s3 + $0x30] sm:$0xf]
    %v1226 = vld [vmem:[%s3 + $0x34] sm:$0xf]
    %v1227 = vld [vmem:[%s3 + $0x38] sm:$0xf]
    %v1228 = vld [vmem:[%s3 + $0x3c] sm:$0xf]
    %v1229 = vld [vmem:[%s3 + $0x40] sm:$0xf]
    %v1230 = vld [vmem:[%s3 + $0x44] sm:$0xf]
    %v1231 = vld [vmem:[%s3 + $0x48] sm:$0xf]
    %v1232 = vld [vmem:[%s3 + $0x4c] sm:$0xf]
    %v1233 = vld [vmem:[%s3 + $0x50] sm:$0xf]
    %v1234 = vld [vmem:[%s3 + $0x54] sm:$0xf]
    %v1235 = vld [vmem:[%s3 + $0x58] sm:$0xf]
    %v1236 = vld [vmem:[%s3 + $0x5c] sm:$0xf]
    %v1237 = vld [vmem:[%s3 + $0x60] sm:$0xf]
    %v1238 = vld [vmem:[%s3 + $0x64] sm:$0xf]
    %v1239 = vld [vmem:[%s3 + $0x68] sm:$0xf]
    %v1240 = vld [vmem:[%s3 + $0x6c] sm:$0xf]
    %v1241 = vld [vmem:[%s3 + $0x70] sm:$0xf]
    %v1242 = vld [vmem:[%s3 + $0x74] sm:$0xf]
    %v1243 = vld [vmem:[%s3 + $0x78] sm:$0xf]
    %v1244 = vld [vmem:[%s3 + $0x7c] sm:$0xf]
    %v1245 = vld [vmem:[%s3 + $0x80] sm:$0xf]
    %v1246 = vld [vmem:[%s3 + $0x84] sm:$0xf]
    %v1247 = vld [vmem:[%s3 + $0x88] sm:$0xf]
    %v1248 = vld [vmem:[%s3 + $0x8c] sm:$0xf]
    %v1249 = vld [vmem:[%s3 + $0x90] sm:$0xf]
    %v1250 = vld [vmem:[%s3 + $0x94] sm:$0xf]
    %v1251 = vld [vmem:[%s3 + $0x98] sm:$0xf]
    %v1252 = vld [vmem:[%s3 + $0x9c] sm:$0xf]
    %v1253 = vld [vmem:[%s3 + $0xa0] sm:$0xf]
    %v1254 = vld [vmem:[%s3 + $0xa4] sm:$0xf]
    %v1255 = vld [vmem:[%s3 + $0xa8] sm:$0xf]
    %v1256 = vld [vmem:[%s3 + $0xac] sm:$0xf]
    %v1257 = vld [vmem:[%s3 + $0xb0] sm:$0xf]
    %v1258 = vld [vmem:[%s3 + $0xb4] sm:$0xf]
    %v1259 = vld [vmem:[%s3 + $0xb8] sm:$0xf]
    %v1260 = vld [vmem:[%s3 + $0xbc] sm:$0xf]
    %v1261 = vunpack.c.l.bf16 %v1213
    %v1262 = vunpack.c.l.bf16 %v1214
    %v1263 = vunpack.c.l.bf16 %v1215
    %v1264 = vunpack.c.l.bf16 %v1216
    %v1265 = vunpack.c.l.bf16 %v1217
    %v1266 = vunpack.c.l.bf16 %v1218
    %v1267 = vunpack.c.l.bf16 %v1219
    %v1268 = vunpack.c.l.bf16 %v1220
    %v1269 = vunpack.c.l.bf16 %v1221
    %v1270 = vunpack.c.l.bf16 %v1222
    %v1271 = vunpack.c.l.bf16 %v1223
    %v1272 = vunpack.c.l.bf16 %v1224
    %v1273 = vunpack.c.l.bf16 %v1225
    %v1274 = vunpack.c.l.bf16 %v1226
    %v1275 = vunpack.c.l.bf16 %v1227
    %v1276 = vunpack.c.l.bf16 %v1228
    %v1277 = vunpack.c.l.bf16 %v1229
    %v1278 = vunpack.c.l.bf16 %v1230
    %v1279 = vunpack.c.l.bf16 %v1231
    %v1280 = vunpack.c.l.bf16 %v1232
    %v1281 = vunpack.c.l.bf16 %v1233
    %v1282 = vunpack.c.l.bf16 %v1234
    %v1283 = vunpack.c.l.bf16 %v1235
    %v1284 = vunpack.c.l.bf16 %v1236
    %v1285 = vunpack.c.l.bf16 %v1237
    %v1286 = vunpack.c.l.bf16 %v1238
    %v1287 = vunpack.c.l.bf16 %v1239
    %v1288 = vunpack.c.l.bf16 %v1240
    %v1289 = vunpack.c.l.bf16 %v1241
    %v1290 = vunpack.c.l.bf16 %v1242
    %v1291 = vunpack.c.l.bf16 %v1243
    %v1292 = vunpack.c.l.bf16 %v1244
    %v1293 = vunpack.c.l.bf16 %v1245
    %v1294 = vunpack.c.l.bf16 %v1246
    %v1295 = vunpack.c.l.bf16 %v1247
    %v1296 = vunpack.c.l.bf16 %v1248
    %v1297 = vunpack.c.l.bf16 %v1249
    %v1298 = vunpack.c.l.bf16 %v1250
    %v1299 = vunpack.c.l.bf16 %v1251
    %v1300 = vunpack.c.l.bf16 %v1252
    %v1301 = vunpack.c.l.bf16 %v1253
    %v1302 = vunpack.c.l.bf16 %v1254
    %v1303 = vunpack.c.l.bf16 %v1255
    %v1304 = vunpack.c.l.bf16 %v1256
    %v1305 = vunpack.c.l.bf16 %v1257
    %v1306 = vunpack.c.l.bf16 %v1258
    %v1307 = vunpack.c.l.bf16 %v1259
    %v1308 = vunpack.c.l.bf16 %v1260
    %v1309 = vmul.f32 %v66, %v1261
    %v1310 = vmul.f32 %v67, %v1262
    %v1311 = vmul.f32 %v68, %v1263
    %v1312 = vmul.f32 %v69, %v1264
    %v1313 = vmul.f32 %v70, %v1265
    %v1314 = vmul.f32 %v71, %v1266
    %v1315 = vmul.f32 %v72, %v1267
    %v1316 = vmul.f32 %v73, %v1268
    %v1317 = vmul.f32 %v74, %v1269
    %v1318 = vmul.f32 %v75, %v1270
    %v1319 = vmul.f32 %v76, %v1271
    %v1320 = vmul.f32 %v77, %v1272
    %v1321 = vmul.f32 %v78, %v1273
    %v1322 = vmul.f32 %v79, %v1274
    %v1323 = vmul.f32 %v80, %v1275
    %v1324 = vmul.f32 %v81, %v1276
    %v1325 = vmul.f32 %v82, %v1277
    %v1326 = vmul.f32 %v83, %v1278
    %v1327 = vmul.f32 %v84, %v1279
    %v1328 = vmul.f32 %v85, %v1280
    %v1329 = vmul.f32 %v86, %v1281
    %v1330 = vmul.f32 %v87, %v1282
    %v1331 = vmul.f32 %v88, %v1283
    %v1332 = vmul.f32 %v89, %v1284
    %v1333 = vmul.f32 %v90, %v1285
    %v1334 = vmul.f32 %v91, %v1286
    %v1335 = vmul.f32 %v92, %v1287
    %v1336 = vmul.f32 %v93, %v1288
    %v1337 = vmul.f32 %v94, %v1289
    %v1338 = vmul.f32 %v95, %v1290
    %v1339 = vmul.f32 %v96, %v1291
    %v1340 = vmul.f32 %v97, %v1292
    %v1341 = vmul.f32 %v98, %v1293
    %v1342 = vmul.f32 %v99, %v1294
    %v1343 = vmul.f32 %v100, %v1295
    %v1344 = vmul.f32 %v101, %v1296
    %v1345 = vmul.f32 %v102, %v1297
    %v1346 = vmul.f32 %v103, %v1298
    %v1347 = vmul.f32 %v104, %v1299
    %v1348 = vmul.f32 %v105, %v1300
    %v1349 = vmul.f32 %v106, %v1301
    %v1350 = vmul.f32 %v107, %v1302
    %v1351 = vmul.f32 %v108, %v1303
    %v1352 = vmul.f32 %v109, %v1304
    %v1353 = vmul.f32 %v110, %v1305
    %v1354 = vmul.f32 %v111, %v1306
    %v1355 = vmul.f32 %v112, %v1307
    %v1356 = vmul.f32 %v113, %v1308
    %v1357 = vsel %vm354, %v1309, 0.0
    %v1358 = vsel %vm354, %v1310, 0.0
    %v1359 = vadd.f32 %v1357, %v1358
    %v1360 = vsel %vm354, %v1311, 0.0
    %v1361 = vadd.f32 %v1359, %v1360
    %v1362 = vsel %vm354, %v1312, 0.0
    %v1363 = vadd.f32 %v1361, %v1362
    %v1364 = vsel %vm354, %v1313, 0.0
    %v1365 = vadd.f32 %v1363, %v1364
    %v1366 = vsel %vm354, %v1314, 0.0
    %v1367 = vadd.f32 %v1365, %v1366
    %v1368 = vsel %vm354, %v1315, 0.0
    %v1369 = vadd.f32 %v1367, %v1368
    %v1370 = vsel %vm354, %v1316, 0.0
    %v1371 = vadd.f32 %v1369, %v1370
    %v1372 = vsel %vm354, %v1317, 0.0
    %v1373 = vadd.f32 %v1371, %v1372
    %v1374 = vsel %vm354, %v1318, 0.0
    %v1375 = vadd.f32 %v1373, %v1374
    %v1376 = vsel %vm354, %v1319, 0.0
    %v1377 = vadd.f32 %v1375, %v1376
    %v1378 = vsel %vm354, %v1320, 0.0
    %v1379 = vadd.f32 %v1377, %v1378
    %v1380 = vsel %vm354, %v1321, 0.0
    %v1381 = vadd.f32 %v1379, %v1380
    %v1382 = vsel %vm354, %v1322, 0.0
    %v1383 = vadd.f32 %v1381, %v1382
    %v1384 = vsel %vm354, %v1323, 0.0
    %v1385 = vadd.f32 %v1383, %v1384
    %v1386 = vsel %vm354, %v1324, 0.0
    %v1387 = vadd.f32 %v1385, %v1386
    %v1388 = vsel %vm354, %v1325, 0.0
    %v1389 = vadd.f32 %v1387, %v1388
    %v1390 = vsel %vm354, %v1326, 0.0
    %v1391 = vadd.f32 %v1389, %v1390
    %v1392 = vsel %vm354, %v1327, 0.0
    %v1393 = vadd.f32 %v1391, %v1392
    %v1394 = vsel %vm354, %v1328, 0.0
    %v1395 = vadd.f32 %v1393, %v1394
    %v1396 = vsel %vm354, %v1329, 0.0
    %v1397 = vadd.f32 %v1395, %v1396
    %v1398 = vsel %vm354, %v1330, 0.0
    %v1399 = vadd.f32 %v1397, %v1398
    %v1400 = vsel %vm354, %v1331, 0.0
    %v1401 = vadd.f32 %v1399, %v1400
    %v1402 = vsel %vm354, %v1332, 0.0
    %v1403 = vadd.f32 %v1401, %v1402
    %v1404 = vsel %vm354, %v1333, 0.0
    %v1405 = vadd.f32 %v1403, %v1404
    %v1406 = vsel %vm354, %v1334, 0.0
    %v1407 = vadd.f32 %v1405, %v1406
    %v1408 = vsel %vm354, %v1335, 0.0
    %v1409 = vadd.f32 %v1407, %v1408
    %v1410 = vsel %vm354, %v1336, 0.0
    %v1411 = vadd.f32 %v1409, %v1410
    %v1412 = vsel %vm354, %v1337, 0.0
    %v1413 = vadd.f32 %v1411, %v1412
    %v1414 = vsel %vm354, %v1338, 0.0
    %v1415 = vadd.f32 %v1413, %v1414
    %v1416 = vsel %vm354, %v1339, 0.0
    %v1417 = vadd.f32 %v1415, %v1416
    %v1418 = vsel %vm354, %v1340, 0.0
    %v1419 = vadd.f32 %v1417, %v1418
    %v1420 = vsel %vm354, %v1341, 0.0
    %v1421 = vadd.f32 %v1419, %v1420
    %v1422 = vsel %vm354, %v1342, 0.0
    %v1423 = vadd.f32 %v1421, %v1422
    %v1424 = vsel %vm354, %v1343, 0.0
    %v1425 = vadd.f32 %v1423, %v1424
    %v1426 = vsel %vm354, %v1344, 0.0
    %v1427 = vadd.f32 %v1425, %v1426
    %v1428 = vsel %vm354, %v1345, 0.0
    %v1429 = vadd.f32 %v1427, %v1428
    %v1430 = vsel %vm354, %v1346, 0.0
    %v1431 = vadd.f32 %v1429, %v1430
    %v1432 = vsel %vm354, %v1347, 0.0
    %v1433 = vadd.f32 %v1431, %v1432
    %v1434 = vsel %vm354, %v1348, 0.0
    %v1435 = vadd.f32 %v1433, %v1434
    %v1436 = vsel %vm354, %v1349, 0.0
    %v1437 = vadd.f32 %v1435, %v1436
    %v1438 = vsel %vm354, %v1350, 0.0
    %v1439 = vadd.f32 %v1437, %v1438
    %v1440 = vsel %vm354, %v1351, 0.0
    %v1441 = vadd.f32 %v1439, %v1440
    %v1442 = vsel %vm354, %v1352, 0.0
    %v1443 = vadd.f32 %v1441, %v1442
    %v1444 = vsel %vm354, %v1353, 0.0
    %v1445 = vadd.f32 %v1443, %v1444
    %v1446 = vsel %vm354, %v1354, 0.0
    %v1447 = vadd.f32 %v1445, %v1446
    %v1448 = vsel %vm354, %v1355, 0.0
    %v1449 = vadd.f32 %v1447, %v1448
    %v1450 = vsel %vm354, %v1356, 0.0
    %v1451 = vadd.f32 %v1449, %v1450
    %v1452 = vrot.slane %v1451, 4
    %v1453 = vadd.f32 %v1451, %v1452
    %v1454 = vrot.slane %v1453, 2
    %v1455 = vadd.f32 %v1453, %v1454
    %v1456 = vrot.slane %v1455, 1
    %v1457 = vadd.f32 %v1455, %v1456
    %v1458 = vmul.f32 %v1261, %v1261
    %v1459 = vmul.f32 %v1262, %v1262
    %v1460 = vmul.f32 %v1263, %v1263
    %v1461 = vmul.f32 %v1264, %v1264
    %v1462 = vmul.f32 %v1265, %v1265
    %v1463 = vmul.f32 %v1266, %v1266
    %v1464 = vmul.f32 %v1267, %v1267
    %v1465 = vmul.f32 %v1268, %v1268
    %v1466 = vmul.f32 %v1269, %v1269
    %v1467 = vmul.f32 %v1270, %v1270
    %v1468 = vmul.f32 %v1271, %v1271
    %v1469 = vmul.f32 %v1272, %v1272
    %v1470 = vmul.f32 %v1273, %v1273
    %v1471 = vmul.f32 %v1274, %v1274
    %v1472 = vmul.f32 %v1275, %v1275
    %v1473 = vmul.f32 %v1276, %v1276
    %v1474 = vmul.f32 %v1277, %v1277
    %v1475 = vmul.f32 %v1278, %v1278
    %v1476 = vmul.f32 %v1279, %v1279
    %v1477 = vmul.f32 %v1280, %v1280
    %v1478 = vmul.f32 %v1281, %v1281
    %v1479 = vmul.f32 %v1282, %v1282
    %v1480 = vmul.f32 %v1283, %v1283
    %v1481 = vmul.f32 %v1284, %v1284
    %v1482 = vmul.f32 %v1285, %v1285
    %v1483 = vmul.f32 %v1286, %v1286
    %v1484 = vmul.f32 %v1287, %v1287
    %v1485 = vmul.f32 %v1288, %v1288
    %v1486 = vmul.f32 %v1289, %v1289
    %v1487 = vmul.f32 %v1290, %v1290
    %v1488 = vmul.f32 %v1291, %v1291
    %v1489 = vmul.f32 %v1292, %v1292
    %v1490 = vmul.f32 %v1293, %v1293
    %v1491 = vmul.f32 %v1294, %v1294
    %v1492 = vmul.f32 %v1295, %v1295
    %v1493 = vmul.f32 %v1296, %v1296
    %v1494 = vmul.f32 %v1297, %v1297
    %v1495 = vmul.f32 %v1298, %v1298
    %v1496 = vmul.f32 %v1299, %v1299
    %v1497 = vmul.f32 %v1300, %v1300
    %v1498 = vmul.f32 %v1301, %v1301
    %v1499 = vmul.f32 %v1302, %v1302
    %v1500 = vmul.f32 %v1303, %v1303
    %v1501 = vmul.f32 %v1304, %v1304
    %v1502 = vmul.f32 %v1305, %v1305
    %v1503 = vmul.f32 %v1306, %v1306
    %v1504 = vmul.f32 %v1307, %v1307
    %v1505 = vmul.f32 %v1308, %v1308
    %v1506 = vsel %vm354, %v1458, 0.0
    %v1507 = vsel %vm354, %v1459, 0.0
    %v1508 = vadd.f32 %v1506, %v1507
    %v1509 = vsel %vm354, %v1460, 0.0
    %v1510 = vadd.f32 %v1508, %v1509
    %v1511 = vsel %vm354, %v1461, 0.0
    %v1512 = vadd.f32 %v1510, %v1511
    %v1513 = vsel %vm354, %v1462, 0.0
    %v1514 = vadd.f32 %v1512, %v1513
    %v1515 = vsel %vm354, %v1463, 0.0
    %v1516 = vadd.f32 %v1514, %v1515
    %v1517 = vsel %vm354, %v1464, 0.0
    %v1518 = vadd.f32 %v1516, %v1517
    %v1519 = vsel %vm354, %v1465, 0.0
    %v1520 = vadd.f32 %v1518, %v1519
    %v1521 = vsel %vm354, %v1466, 0.0
    %v1522 = vadd.f32 %v1520, %v1521
    %v1523 = vsel %vm354, %v1467, 0.0
    %v1524 = vadd.f32 %v1522, %v1523
    %v1525 = vsel %vm354, %v1468, 0.0
    %v1526 = vadd.f32 %v1524, %v1525
    %v1527 = vsel %vm354, %v1469, 0.0
    %v1528 = vadd.f32 %v1526, %v1527
    %v1529 = vsel %vm354, %v1470, 0.0
    %v1530 = vadd.f32 %v1528, %v1529
    %v1531 = vsel %vm354, %v1471, 0.0
    %v1532 = vadd.f32 %v1530, %v1531
    %v1533 = vsel %vm354, %v1472, 0.0
    %v1534 = vadd.f32 %v1532, %v1533
    %v1535 = vsel %vm354, %v1473, 0.0
    %v1536 = vadd.f32 %v1534, %v1535
    %v1537 = vsel %vm354, %v1474, 0.0
    %v1538 = vadd.f32 %v1536, %v1537
    %v1539 = vsel %vm354, %v1475, 0.0
    %v1540 = vadd.f32 %v1538, %v1539
    %v1541 = vsel %vm354, %v1476, 0.0
    %v1542 = vadd.f32 %v1540, %v1541
    %v1543 = vsel %vm354, %v1477, 0.0
    %v1544 = vadd.f32 %v1542, %v1543
    %v1545 = vsel %vm354, %v1478, 0.0
    %v1546 = vadd.f32 %v1544, %v1545
    %v1547 = vsel %vm354, %v1479, 0.0
    %v1548 = vadd.f32 %v1546, %v1547
    %v1549 = vsel %vm354, %v1480, 0.0
    %v1550 = vadd.f32 %v1548, %v1549
    %v1551 = vsel %vm354, %v1481, 0.0
    %v1552 = vadd.f32 %v1550, %v1551
    %v1553 = vsel %vm354, %v1482, 0.0
    %v1554 = vadd.f32 %v1552, %v1553
    %v1555 = vsel %vm354, %v1483, 0.0
    %v1556 = vadd.f32 %v1554, %v1555
    %v1557 = vsel %vm354, %v1484, 0.0
    %v1558 = vadd.f32 %v1556, %v1557
    %v1559 = vsel %vm354, %v1485, 0.0
    %v1560 = vadd.f32 %v1558, %v1559
    %v1561 = vsel %vm354, %v1486, 0.0
    %v1562 = vadd.f32 %v1560, %v1561
    %v1563 = vsel %vm354, %v1487, 0.0
    %v1564 = vadd.f32 %v1562, %v1563
    %v1565 = vsel %vm354, %v1488, 0.0
    %v1566 = vadd.f32 %v1564, %v1565
    %v1567 = vsel %vm354, %v1489, 0.0
    %v1568 = vadd.f32 %v1566, %v1567
    %v1569 = vsel %vm354, %v1490, 0.0
    %v1570 = vadd.f32 %v1568, %v1569
    %v1571 = vsel %vm354, %v1491, 0.0
    %v1572 = vadd.f32 %v1570, %v1571
    %v1573 = vsel %vm354, %v1492, 0.0
    %v1574 = vadd.f32 %v1572, %v1573
    %v1575 = vsel %vm354, %v1493, 0.0
    %v1576 = vadd.f32 %v1574, %v1575
    %v1577 = vsel %vm354, %v1494, 0.0
    %v1578 = vadd.f32 %v1576, %v1577
    %v1579 = vsel %vm354, %v1495, 0.0
    %v1580 = vadd.f32 %v1578, %v1579
    %v1581 = vsel %vm354, %v1496, 0.0
    %v1582 = vadd.f32 %v1580, %v1581
    %v1583 = vsel %vm354, %v1497, 0.0
    %v1584 = vadd.f32 %v1582, %v1583
    %v1585 = vsel %vm354, %v1498, 0.0
    %v1586 = vadd.f32 %v1584, %v1585
    %v1587 = vsel %vm354, %v1499, 0.0
    %v1588 = vadd.f32 %v1586, %v1587
    %v1589 = vsel %vm354, %v1500, 0.0
    %v1590 = vadd.f32 %v1588, %v1589
    %v1591 = vsel %vm354, %v1501, 0.0
    %v1592 = vadd.f32 %v1590, %v1591
    %v1593 = vsel %vm354, %v1502, 0.0
    %v1594 = vadd.f32 %v1592, %v1593
    %v1595 = vsel %vm354, %v1503, 0.0
    %v1596 = vadd.f32 %v1594, %v1595
    %v1597 = vsel %vm354, %v1504, 0.0
    %v1598 = vadd.f32 %v1596, %v1597
    %v1599 = vsel %vm354, %v1505, 0.0
    %v1600 = vadd.f32 %v1598, %v1599
    %v1601 = vrot.slane %v1600, 4
    %v1602 = vadd.f32 %v1600, %v1601
    %v1603 = vrot.slane %v1602, 2
    %v1604 = vadd.f32 %v1602, %v1603
    %v1605 = vrot.slane %v1604, 1
    %v1606 = vadd.f32 %v1604, %v1605
    %v1607 = vmul.f32 %v455, %v1606
    %v1608 = vmax.f32 %v1607, 1e-16
    %v1609 = vrsqrt.pop %v1608
    %v1610 = vmul.f32 %v1457, %v1609
    %v1611 = vadd.f32 %v1610, 0.0
    %v1612 = vld [vmem:[%s3 + $0xc0] sm:$0xf]
    %v1613 = vld [vmem:[%s3 + $0xc4] sm:$0xf]
    %v1614 = vld [vmem:[%s3 + $0xc8] sm:$0xf]
    %v1615 = vld [vmem:[%s3 + $0xcc] sm:$0xf]
    %v1616 = vld [vmem:[%s3 + $0xd0] sm:$0xf]
    %v1617 = vld [vmem:[%s3 + $0xd4] sm:$0xf]
    %v1618 = vld [vmem:[%s3 + $0xd8] sm:$0xf]
    %v1619 = vld [vmem:[%s3 + $0xdc] sm:$0xf]
    %v1620 = vld [vmem:[%s3 + $0xe0] sm:$0xf]
    %v1621 = vld [vmem:[%s3 + $0xe4] sm:$0xf]
    %v1622 = vld [vmem:[%s3 + $0xe8] sm:$0xf]
    %v1623 = vld [vmem:[%s3 + $0xec] sm:$0xf]
    %v1624 = vld [vmem:[%s3 + $0xf0] sm:$0xf]
    %v1625 = vld [vmem:[%s3 + $0xf4] sm:$0xf]
    %v1626 = vld [vmem:[%s3 + $0xf8] sm:$0xf]
    %v1627 = vld [vmem:[%s3 + $0xfc] sm:$0xf]
    %v1628 = vld [vmem:[%s3 + $0x100] sm:$0xf]
    %v1629 = vld [vmem:[%s3 + $0x104] sm:$0xf]
    %v1630 = vld [vmem:[%s3 + $0x108] sm:$0xf]
    %v1631 = vld [vmem:[%s3 + $0x10c] sm:$0xf]
    %v1632 = vld [vmem:[%s3 + $0x110] sm:$0xf]
    %v1633 = vld [vmem:[%s3 + $0x114] sm:$0xf]
    %v1634 = vld [vmem:[%s3 + $0x118] sm:$0xf]
    %v1635 = vld [vmem:[%s3 + $0x11c] sm:$0xf]
    %v1636 = vld [vmem:[%s3 + $0x120] sm:$0xf]
    %v1637 = vld [vmem:[%s3 + $0x124] sm:$0xf]
    %v1638 = vld [vmem:[%s3 + $0x128] sm:$0xf]
    %v1639 = vld [vmem:[%s3 + $0x12c] sm:$0xf]
    %v1640 = vld [vmem:[%s3 + $0x130] sm:$0xf]
    %v1641 = vld [vmem:[%s3 + $0x134] sm:$0xf]
    %v1642 = vld [vmem:[%s3 + $0x138] sm:$0xf]
    %v1643 = vld [vmem:[%s3 + $0x13c] sm:$0xf]
    %v1644 = vld [vmem:[%s3 + $0x140] sm:$0xf]
    %v1645 = vld [vmem:[%s3 + $0x144] sm:$0xf]
    %v1646 = vld [vmem:[%s3 + $0x148] sm:$0xf]
    %v1647 = vld [vmem:[%s3 + $0x14c] sm:$0xf]
    %v1648 = vld [vmem:[%s3 + $0x150] sm:$0xf]
    %v1649 = vld [vmem:[%s3 + $0x154] sm:$0xf]
    %v1650 = vld [vmem:[%s3 + $0x158] sm:$0xf]
    %v1651 = vld [vmem:[%s3 + $0x15c] sm:$0xf]
    %v1652 = vld [vmem:[%s3 + $0x160] sm:$0xf]
    %v1653 = vld [vmem:[%s3 + $0x164] sm:$0xf]
    %v1654 = vld [vmem:[%s3 + $0x168] sm:$0xf]
    %v1655 = vld [vmem:[%s3 + $0x16c] sm:$0xf]
    %v1656 = vld [vmem:[%s3 + $0x170] sm:$0xf]
    %v1657 = vld [vmem:[%s3 + $0x174] sm:$0xf]
    %v1658 = vld [vmem:[%s3 + $0x178] sm:$0xf]
    %v1659 = vld [vmem:[%s3 + $0x17c] sm:$0xf]
    %v1660 = vunpack.c.l.bf16 %v1612
    %v1661 = vunpack.c.l.bf16 %v1613
    %v1662 = vunpack.c.l.bf16 %v1614
    %v1663 = vunpack.c.l.bf16 %v1615
    %v1664 = vunpack.c.l.bf16 %v1616
    %v1665 = vunpack.c.l.bf16 %v1617
    %v1666 = vunpack.c.l.bf16 %v1618
    %v1667 = vunpack.c.l.bf16 %v1619
    %v1668 = vunpack.c.l.bf16 %v1620
    %v1669 = vunpack.c.l.bf16 %v1621
    %v1670 = vunpack.c.l.bf16 %v1622
    %v1671 = vunpack.c.l.bf16 %v1623
    %v1672 = vunpack.c.l.bf16 %v1624
    %v1673 = vunpack.c.l.bf16 %v1625
    %v1674 = vunpack.c.l.bf16 %v1626
    %v1675 = vunpack.c.l.bf16 %v1627
    %v1676 = vunpack.c.l.bf16 %v1628
    %v1677 = vunpack.c.l.bf16 %v1629
    %v1678 = vunpack.c.l.bf16 %v1630
    %v1679 = vunpack.c.l.bf16 %v1631
    %v1680 = vunpack.c.l.bf16 %v1632
    %v1681 = vunpack.c.l.bf16 %v1633
    %v1682 = vunpack.c.l.bf16 %v1634
    %v1683 = vunpack.c.l.bf16 %v1635
    %v1684 = vunpack.c.l.bf16 %v1636
    %v1685 = vunpack.c.l.bf16 %v1637
    %v1686 = vunpack.c.l.bf16 %v1638
    %v1687 = vunpack.c.l.bf16 %v1639
    %v1688 = vunpack.c.l.bf16 %v1640
    %v1689 = vunpack.c.l.bf16 %v1641
    %v1690 = vunpack.c.l.bf16 %v1642
    %v1691 = vunpack.c.l.bf16 %v1643
    %v1692 = vunpack.c.l.bf16 %v1644
    %v1693 = vunpack.c.l.bf16 %v1645
    %v1694 = vunpack.c.l.bf16 %v1646
    %v1695 = vunpack.c.l.bf16 %v1647
    %v1696 = vunpack.c.l.bf16 %v1648
    %v1697 = vunpack.c.l.bf16 %v1649
    %v1698 = vunpack.c.l.bf16 %v1650
    %v1699 = vunpack.c.l.bf16 %v1651
    %v1700 = vunpack.c.l.bf16 %v1652
    %v1701 = vunpack.c.l.bf16 %v1653
    %v1702 = vunpack.c.l.bf16 %v1654
    %v1703 = vunpack.c.l.bf16 %v1655
    %v1704 = vunpack.c.l.bf16 %v1656
    %v1705 = vunpack.c.l.bf16 %v1657
    %v1706 = vunpack.c.l.bf16 %v1658
    %v1707 = vunpack.c.l.bf16 %v1659
    %v1708 = vmul.f32 %v66, %v1660
    %v1709 = vmul.f32 %v67, %v1661
    %v1710 = vmul.f32 %v68, %v1662
    %v1711 = vmul.f32 %v69, %v1663
    %v1712 = vmul.f32 %v70, %v1664
    %v1713 = vmul.f32 %v71, %v1665
    %v1714 = vmul.f32 %v72, %v1666
    %v1715 = vmul.f32 %v73, %v1667
    %v1716 = vmul.f32 %v74, %v1668
    %v1717 = vmul.f32 %v75, %v1669
    %v1718 = vmul.f32 %v76, %v1670
    %v1719 = vmul.f32 %v77, %v1671
    %v1720 = vmul.f32 %v78, %v1672
    %v1721 = vmul.f32 %v79, %v1673
    %v1722 = vmul.f32 %v80, %v1674
    %v1723 = vmul.f32 %v81, %v1675
    %v1724 = vmul.f32 %v82, %v1676
    %v1725 = vmul.f32 %v83, %v1677
    %v1726 = vmul.f32 %v84, %v1678
    %v1727 = vmul.f32 %v85, %v1679
    %v1728 = vmul.f32 %v86, %v1680
    %v1729 = vmul.f32 %v87, %v1681
    %v1730 = vmul.f32 %v88, %v1682
    %v1731 = vmul.f32 %v89, %v1683
    %v1732 = vmul.f32 %v90, %v1684
    %v1733 = vmul.f32 %v91, %v1685
    %v1734 = vmul.f32 %v92, %v1686
    %v1735 = vmul.f32 %v93, %v1687
    %v1736 = vmul.f32 %v94, %v1688
    %v1737 = vmul.f32 %v95, %v1689
    %v1738 = vmul.f32 %v96, %v1690
    %v1739 = vmul.f32 %v97, %v1691
    %v1740 = vmul.f32 %v98, %v1692
    %v1741 = vmul.f32 %v99, %v1693
    %v1742 = vmul.f32 %v100, %v1694
    %v1743 = vmul.f32 %v101, %v1695
    %v1744 = vmul.f32 %v102, %v1696
    %v1745 = vmul.f32 %v103, %v1697
    %v1746 = vmul.f32 %v104, %v1698
    %v1747 = vmul.f32 %v105, %v1699
    %v1748 = vmul.f32 %v106, %v1700
    %v1749 = vmul.f32 %v107, %v1701
    %v1750 = vmul.f32 %v108, %v1702
    %v1751 = vmul.f32 %v109, %v1703
    %v1752 = vmul.f32 %v110, %v1704
    %v1753 = vmul.f32 %v111, %v1705
    %v1754 = vmul.f32 %v112, %v1706
    %v1755 = vmul.f32 %v113, %v1707
    %v1756 = vsel %vm354, %v1708, 0.0
    %v1757 = vsel %vm354, %v1709, 0.0
    %v1758 = vadd.f32 %v1756, %v1757
    %v1759 = vsel %vm354, %v1710, 0.0
    %v1760 = vadd.f32 %v1758, %v1759
    %v1761 = vsel %vm354, %v1711, 0.0
    %v1762 = vadd.f32 %v1760, %v1761
    %v1763 = vsel %vm354, %v1712, 0.0
    %v1764 = vadd.f32 %v1762, %v1763
    %v1765 = vsel %vm354, %v1713, 0.0
    %v1766 = vadd.f32 %v1764, %v1765
    %v1767 = vsel %vm354, %v1714, 0.0
    %v1768 = vadd.f32 %v1766, %v1767
    %v1769 = vsel %vm354, %v1715, 0.0
    %v1770 = vadd.f32 %v1768, %v1769
    %v1771 = vsel %vm354, %v1716, 0.0
    %v1772 = vadd.f32 %v1770, %v1771
    %v1773 = vsel %vm354, %v1717, 0.0
    %v1774 = vadd.f32 %v1772, %v1773
    %v1775 = vsel %vm354, %v1718, 0.0
    %v1776 = vadd.f32 %v1774, %v1775
    %v1777 = vsel %vm354, %v1719, 0.0
    %v1778 = vadd.f32 %v1776, %v1777
    %v1779 = vsel %vm354, %v1720, 0.0
    %v1780 = vadd.f32 %v1778, %v1779
    %v1781 = vsel %vm354, %v1721, 0.0
    %v1782 = vadd.f32 %v1780, %v1781
    %v1783 = vsel %vm354, %v1722, 0.0
    %v1784 = vadd.f32 %v1782, %v1783
    %v1785 = vsel %vm354, %v1723, 0.0
    %v1786 = vadd.f32 %v1784, %v1785
    %v1787 = vsel %vm354, %v1724, 0.0
    %v1788 = vadd.f32 %v1786, %v1787
    %v1789 = vsel %vm354, %v1725, 0.0
    %v1790 = vadd.f32 %v1788, %v1789
    %v1791 = vsel %vm354, %v1726, 0.0
    %v1792 = vadd.f32 %v1790, %v1791
    %v1793 = vsel %vm354, %v1727, 0.0
    %v1794 = vadd.f32 %v1792, %v1793
    %v1795 = vsel %vm354, %v1728, 0.0
    %v1796 = vadd.f32 %v1794, %v1795
    %v1797 = vsel %vm354, %v1729, 0.0
    %v1798 = vadd.f32 %v1796, %v1797
    %v1799 = vsel %vm354, %v1730, 0.0
    %v1800 = vadd.f32 %v1798, %v1799
    %v1801 = vsel %vm354, %v1731, 0.0
    %v1802 = vadd.f32 %v1800, %v1801
    %v1803 = vsel %vm354, %v1732, 0.0
    %v1804 = vadd.f32 %v1802, %v1803
    %v1805 = vsel %vm354, %v1733, 0.0
    %v1806 = vadd.f32 %v1804, %v1805
    %v1807 = vsel %vm354, %v1734, 0.0
    %v1808 = vadd.f32 %v1806, %v1807
    %v1809 = vsel %vm354, %v1735, 0.0
    %v1810 = vadd.f32 %v1808, %v1809
    %v1811 = vsel %vm354, %v1736, 0.0
    %v1812 = vadd.f32 %v1810, %v1811
    %v1813 = vsel %vm354, %v1737, 0.0
    %v1814 = vadd.f32 %v1812, %v1813
    %v1815 = vsel %vm354, %v1738, 0.0
    %v1816 = vadd.f32 %v1814, %v1815
    %v1817 = vsel %vm354, %v1739, 0.0
    %v1818 = vadd.f32 %v1816, %v1817
    %v1819 = vsel %vm354, %v1740, 0.0
    %v1820 = vadd.f32 %v1818, %v1819
    %v1821 = vsel %vm354, %v1741, 0.0
    %v1822 = vadd.f32 %v1820, %v1821
    %v1823 = vsel %vm354, %v1742, 0.0
    %v1824 = vadd.f32 %v1822, %v1823
    %v1825 = vsel %vm354, %v1743, 0.0
    %v1826 = vadd.f32 %v1824, %v1825
    %v1827 = vsel %vm354, %v1744, 0.0
    %v1828 = vadd.f32 %v1826, %v1827
    %v1829 = vsel %vm354, %v1745, 0.0
    %v1830 = vadd.f32 %v1828, %v1829
    %v1831 = vsel %vm354, %v1746, 0.0
    %v1832 = vadd.f32 %v1830, %v1831
    %v1833 = vsel %vm354, %v1747, 0.0
    %v1834 = vadd.f32 %v1832, %v1833
    %v1835 = vsel %vm354, %v1748, 0.0
    %v1836 = vadd.f32 %v1834, %v1835
    %v1837 = vsel %vm354, %v1749, 0.0
    %v1838 = vadd.f32 %v1836, %v1837
    %v1839 = vsel %vm354, %v1750, 0.0
    %v1840 = vadd.f32 %v1838, %v1839
    %v1841 = vsel %vm354, %v1751, 0.0
    %v1842 = vadd.f32 %v1840, %v1841
    %v1843 = vsel %vm354, %v1752, 0.0
    %v1844 = vadd.f32 %v1842, %v1843
    %v1845 = vsel %vm354, %v1753, 0.0
    %v1846 = vadd.f32 %v1844, %v1845
    %v1847 = vsel %vm354, %v1754, 0.0
    %v1848 = vadd.f32 %v1846, %v1847
    %v1849 = vsel %vm354, %v1755, 0.0
    %v1850 = vadd.f32 %v1848, %v1849
    %v1851 = vrot.slane %v1850, 4
    %v1852 = vadd.f32 %v1850, %v1851
    %v1853 = vrot.slane %v1852, 2
    %v1854 = vadd.f32 %v1852, %v1853
    %v1855 = vrot.slane %v1854, 1
    %v1856 = vadd.f32 %v1854, %v1855
    %v1857 = vmul.f32 %v1660, %v1660
    %v1858 = vmul.f32 %v1661, %v1661
    %v1859 = vmul.f32 %v1662, %v1662
    %v1860 = vmul.f32 %v1663, %v1663
    %v1861 = vmul.f32 %v1664, %v1664
    %v1862 = vmul.f32 %v1665, %v1665
    %v1863 = vmul.f32 %v1666, %v1666
    %v1864 = vmul.f32 %v1667, %v1667
    %v1865 = vmul.f32 %v1668, %v1668
    %v1866 = vmul.f32 %v1669, %v1669
    %v1867 = vmul.f32 %v1670, %v1670
    %v1868 = vmul.f32 %v1671, %v1671
    %v1869 = vmul.f32 %v1672, %v1672
    %v1870 = vmul.f32 %v1673, %v1673
    %v1871 = vmul.f32 %v1674, %v1674
    %v1872 = vmul.f32 %v1675, %v1675
    %v1873 = vmul.f32 %v1676, %v1676
    %v1874 = vmul.f32 %v1677, %v1677
    %v1875 = vmul.f32 %v1678, %v1678
    %v1876 = vmul.f32 %v1679, %v1679
    %v1877 = vmul.f32 %v1680, %v1680
    %v1878 = vmul.f32 %v1681, %v1681
    %v1879 = vmul.f32 %v1682, %v1682
    %v1880 = vmul.f32 %v1683, %v1683
    %v1881 = vmul.f32 %v1684, %v1684
    %v1882 = vmul.f32 %v1685, %v1685
    %v1883 = vmul.f32 %v1686, %v1686
    %v1884 = vmul.f32 %v1687, %v1687
    %v1885 = vmul.f32 %v1688, %v1688
    %v1886 = vmul.f32 %v1689, %v1689
    %v1887 = vmul.f32 %v1690, %v1690
    %v1888 = vmul.f32 %v1691, %v1691
    %v1889 = vmul.f32 %v1692, %v1692
    %v1890 = vmul.f32 %v1693, %v1693
    %v1891 = vmul.f32 %v1694, %v1694
    %v1892 = vmul.f32 %v1695, %v1695
    %v1893 = vmul.f32 %v1696, %v1696
    %v1894 = vmul.f32 %v1697, %v1697
    %v1895 = vmul.f32 %v1698, %v1698
    %v1896 = vmul.f32 %v1699, %v1699
    %v1897 = vmul.f32 %v1700, %v1700
    %v1898 = vmul.f32 %v1701, %v1701
    %v1899 = vmul.f32 %v1702, %v1702
    %v1900 = vmul.f32 %v1703, %v1703
    %v1901 = vmul.f32 %v1704, %v1704
    %v1902 = vmul.f32 %v1705, %v1705
    %v1903 = vmul.f32 %v1706, %v1706
    %v1904 = vmul.f32 %v1707, %v1707
    %v1905 = vsel %vm354, %v1857, 0.0
    %v1906 = vsel %vm354, %v1858, 0.0
    %v1907 = vadd.f32 %v1905, %v1906
    %v1908 = vsel %vm354, %v1859, 0.0
    %v1909 = vadd.f32 %v1907, %v1908
    %v1910 = vsel %vm354, %v1860, 0.0
    %v1911 = vadd.f32 %v1909, %v1910
    %v1912 = vsel %vm354, %v1861, 0.0
    %v1913 = vadd.f32 %v1911, %v1912
    %v1914 = vsel %vm354, %v1862, 0.0
    %v1915 = vadd.f32 %v1913, %v1914
    %v1916 = vsel %vm354, %v1863, 0.0
    %v1917 = vadd.f32 %v1915, %v1916
    %v1918 = vsel %vm354, %v1864, 0.0
    %v1919 = vadd.f32 %v1917, %v1918
    %v1920 = vsel %vm354, %v1865, 0.0
    %v1921 = vadd.f32 %v1919, %v1920
    %v1922 = vsel %vm354, %v1866, 0.0
    %v1923 = vadd.f32 %v1921, %v1922
    %v1924 = vsel %vm354, %v1867, 0.0
    %v1925 = vadd.f32 %v1923, %v1924
    %v1926 = vsel %vm354, %v1868, 0.0
    %v1927 = vadd.f32 %v1925, %v1926
    %v1928 = vsel %vm354, %v1869, 0.0
    %v1929 = vadd.f32 %v1927, %v1928
    %v1930 = vsel %vm354, %v1870, 0.0
    %v1931 = vadd.f32 %v1929, %v1930
    %v1932 = vsel %vm354, %v1871, 0.0
    %v1933 = vadd.f32 %v1931, %v1932
    %v1934 = vsel %vm354, %v1872, 0.0
    %v1935 = vadd.f32 %v1933, %v1934
    %v1936 = vsel %vm354, %v1873, 0.0
    %v1937 = vadd.f32 %v1935, %v1936
    %v1938 = vsel %vm354, %v1874, 0.0
    %v1939 = vadd.f32 %v1937, %v1938
    %v1940 = vsel %vm354, %v1875, 0.0
    %v1941 = vadd.f32 %v1939, %v1940
    %v1942 = vsel %vm354, %v1876, 0.0
    %v1943 = vadd.f32 %v1941, %v1942
    %v1944 = vsel %vm354, %v1877, 0.0
    %v1945 = vadd.f32 %v1943, %v1944
    %v1946 = vsel %vm354, %v1878, 0.0
    %v1947 = vadd.f32 %v1945, %v1946
    %v1948 = vsel %vm354, %v1879, 0.0
    %v1949 = vadd.f32 %v1947, %v1948
    %v1950 = vsel %vm354, %v1880, 0.0
    %v1951 = vadd.f32 %v1949, %v1950
    %v1952 = vsel %vm354, %v1881, 0.0
    %v1953 = vadd.f32 %v1951, %v1952
    %v1954 = vsel %vm354, %v1882, 0.0
    %v1955 = vadd.f32 %v1953, %v1954
    %v1956 = vsel %vm354, %v1883, 0.0
    %v1957 = vadd.f32 %v1955, %v1956
    %v1958 = vsel %vm354, %v1884, 0.0
    %v1959 = vadd.f32 %v1957, %v1958
    %v1960 = vsel %vm354, %v1885, 0.0
    %v1961 = vadd.f32 %v1959, %v1960
    %v1962 = vsel %vm354, %v1886, 0.0
    %v1963 = vadd.f32 %v1961, %v1962
    %v1964 = vsel %vm354, %v1887, 0.0
    %v1965 = vadd.f32 %v1963, %v1964
    %v1966 = vsel %vm354, %v1888, 0.0
    %v1967 = vadd.f32 %v1965, %v1966
    %v1968 = vsel %vm354, %v1889, 0.0
    %v1969 = vadd.f32 %v1967, %v1968
    %v1970 = vsel %vm354, %v1890, 0.0
    %v1971 = vadd.f32 %v1969, %v1970
    %v1972 = vsel %vm354, %v1891, 0.0
    %v1973 = vadd.f32 %v1971, %v1972
    %v1974 = vsel %vm354, %v1892, 0.0
    %v1975 = vadd.f32 %v1973, %v1974
    %v1976 = vsel %vm354, %v1893, 0.0
    %v1977 = vadd.f32 %v1975, %v1976
    %v1978 = vsel %vm354, %v1894, 0.0
    %v1979 = vadd.f32 %v1977, %v1978
    %v1980 = vsel %vm354, %v1895, 0.0
    %v1981 = vadd.f32 %v1979, %v1980
    %v1982 = vsel %vm354, %v1896, 0.0
    %v1983 = vadd.f32 %v1981, %v1982
    %v1984 = vsel %vm354, %v1897, 0.0
    %v1985 = vadd.f32 %v1983, %v1984
    %v1986 = vsel %vm354, %v1898, 0.0
    %v1987 = vadd.f32 %v1985, %v1986
    %v1988 = vsel %vm354, %v1899, 0.0
    %v1989 = vadd.f32 %v1987, %v1988
    %v1990 = vsel %vm354, %v1900, 0.0
    %v1991 = vadd.f32 %v1989, %v1990
    %v1992 = vsel %vm354, %v1901, 0.0
    %v1993 = vadd.f32 %v1991, %v1992
    %v1994 = vsel %vm354, %v1902, 0.0
    %v1995 = vadd.f32 %v1993, %v1994
    %v1996 = vsel %vm354, %v1903, 0.0
    %v1997 = vadd.f32 %v1995, %v1996
    %v1998 = vsel %vm354, %v1904, 0.0
    %v1999 = vadd.f32 %v1997, %v1998
    %v2000 = vrot.slane %v1999, 4
    %v2001 = vadd.f32 %v1999, %v2000
    %v2002 = vrot.slane %v2001, 2
    %v2003 = vadd.f32 %v2001, %v2002
    %v2004 = vrot.slane %v2003, 1
    %v2005 = vadd.f32 %v2003, %v2004
    %v2006 = vmul.f32 %v455, %v2005
    %v2007 = vmax.f32 %v2006, 1e-16
    %v2008 = vrsqrt.pop %v2007
    %v2009 = vmul.f32 %v1856, %v2008
    %v2010 = vadd.f32 %v1611, %v2009
    %v2011 = vld [vmem:[%s3 + $0x180] sm:$0xf]
    %v2012 = vld [vmem:[%s3 + $0x184] sm:$0xf]
    %v2013 = vld [vmem:[%s3 + $0x188] sm:$0xf]
    %v2014 = vld [vmem:[%s3 + $0x18c] sm:$0xf]
    %v2015 = vld [vmem:[%s3 + $0x190] sm:$0xf]
    %v2016 = vld [vmem:[%s3 + $0x194] sm:$0xf]
    %v2017 = vld [vmem:[%s3 + $0x198] sm:$0xf]
    %v2018 = vld [vmem:[%s3 + $0x19c] sm:$0xf]
    %v2019 = vld [vmem:[%s3 + $0x1a0] sm:$0xf]
    %v2020 = vld [vmem:[%s3 + $0x1a4] sm:$0xf]
    %v2021 = vld [vmem:[%s3 + $0x1a8] sm:$0xf]
    %v2022 = vld [vmem:[%s3 + $0x1ac] sm:$0xf]
    %v2023 = vld [vmem:[%s3 + $0x1b0] sm:$0xf]
    %v2024 = vld [vmem:[%s3 + $0x1b4] sm:$0xf]
    %v2025 = vld [vmem:[%s3 + $0x1b8] sm:$0xf]
    %v2026 = vld [vmem:[%s3 + $0x1bc] sm:$0xf]
    %v2027 = vld [vmem:[%s3 + $0x1c0] sm:$0xf]
    %v2028 = vld [vmem:[%s3 + $0x1c4] sm:$0xf]
    %v2029 = vld [vmem:[%s3 + $0x1c8] sm:$0xf]
    %v2030 = vld [vmem:[%s3 + $0x1cc] sm:$0xf]
    %v2031 = vld [vmem:[%s3 + $0x1d0] sm:$0xf]
    %v2032 = vld [vmem:[%s3 + $0x1d4] sm:$0xf]
    %v2033 = vld [vmem:[%s3 + $0x1d8] sm:$0xf]
    %v2034 = vld [vmem:[%s3 + $0x1dc] sm:$0xf]
    %v2035 = vld [vmem:[%s3 + $0x1e0] sm:$0xf]
    %v2036 = vld [vmem:[%s3 + $0x1e4] sm:$0xf]
    %v2037 = vld [vmem:[%s3 + $0x1e8] sm:$0xf]
    %v2038 = vld [vmem:[%s3 + $0x1ec] sm:$0xf]
    %v2039 = vld [vmem:[%s3 + $0x1f0] sm:$0xf]
    %v2040 = vld [vmem:[%s3 + $0x1f4] sm:$0xf]
    %v2041 = vld [vmem:[%s3 + $0x1f8] sm:$0xf]
    %v2042 = vld [vmem:[%s3 + $0x1fc] sm:$0xf]
    %v2043 = vld [vmem:[%s3 + $0x200] sm:$0xf]
    %v2044 = vld [vmem:[%s3 + $0x204] sm:$0xf]
    %v2045 = vld [vmem:[%s3 + $0x208] sm:$0xf]
    %v2046 = vld [vmem:[%s3 + $0x20c] sm:$0xf]
    %v2047 = vld [vmem:[%s3 + $0x210] sm:$0xf]
    %v2048 = vld [vmem:[%s3 + $0x214] sm:$0xf]
    %v2049 = vld [vmem:[%s3 + $0x218] sm:$0xf]
    %v2050 = vld [vmem:[%s3 + $0x21c] sm:$0xf]
    %v2051 = vld [vmem:[%s3 + $0x220] sm:$0xf]
    %v2052 = vld [vmem:[%s3 + $0x224] sm:$0xf]
    %v2053 = vld [vmem:[%s3 + $0x228] sm:$0xf]
    %v2054 = vld [vmem:[%s3 + $0x22c] sm:$0xf]
    %v2055 = vld [vmem:[%s3 + $0x230] sm:$0xf]
    %v2056 = vld [vmem:[%s3 + $0x234] sm:$0xf]
    %v2057 = vld [vmem:[%s3 + $0x238] sm:$0xf]
    %v2058 = vld [vmem:[%s3 + $0x23c] sm:$0xf]
    %v2059 = vunpack.c.l.bf16 %v2011
    %v2060 = vunpack.c.l.bf16 %v2012
    %v2061 = vunpack.c.l.bf16 %v2013
    %v2062 = vunpack.c.l.bf16 %v2014
    %v2063 = vunpack.c.l.bf16 %v2015
    %v2064 = vunpack.c.l.bf16 %v2016
    %v2065 = vunpack.c.l.bf16 %v2017
    %v2066 = vunpack.c.l.bf16 %v2018
    %v2067 = vunpack.c.l.bf16 %v2019
    %v2068 = vunpack.c.l.bf16 %v2020
    %v2069 = vunpack.c.l.bf16 %v2021
    %v2070 = vunpack.c.l.bf16 %v2022
    %v2071 = vunpack.c.l.bf16 %v2023
    %v2072 = vunpack.c.l.bf16 %v2024
    %v2073 = vunpack.c.l.bf16 %v2025
    %v2074 = vunpack.c.l.bf16 %v2026
    %v2075 = vunpack.c.l.bf16 %v2027
    %v2076 = vunpack.c.l.bf16 %v2028
    %v2077 = vunpack.c.l.bf16 %v2029
    %v2078 = vunpack.c.l.bf16 %v2030
    %v2079 = vunpack.c.l.bf16 %v2031
    %v2080 = vunpack.c.l.bf16 %v2032
    %v2081 = vunpack.c.l.bf16 %v2033
    %v2082 = vunpack.c.l.bf16 %v2034
    %v2083 = vunpack.c.l.bf16 %v2035
    %v2084 = vunpack.c.l.bf16 %v2036
    %v2085 = vunpack.c.l.bf16 %v2037
    %v2086 = vunpack.c.l.bf16 %v2038
    %v2087 = vunpack.c.l.bf16 %v2039
    %v2088 = vunpack.c.l.bf16 %v2040
    %v2089 = vunpack.c.l.bf16 %v2041
    %v2090 = vunpack.c.l.bf16 %v2042
    %v2091 = vunpack.c.l.bf16 %v2043
    %v2092 = vunpack.c.l.bf16 %v2044
    %v2093 = vunpack.c.l.bf16 %v2045
    %v2094 = vunpack.c.l.bf16 %v2046
    %v2095 = vunpack.c.l.bf16 %v2047
    %v2096 = vunpack.c.l.bf16 %v2048
    %v2097 = vunpack.c.l.bf16 %v2049
    %v2098 = vunpack.c.l.bf16 %v2050
    %v2099 = vunpack.c.l.bf16 %v2051
    %v2100 = vunpack.c.l.bf16 %v2052
    %v2101 = vunpack.c.l.bf16 %v2053
    %v2102 = vunpack.c.l.bf16 %v2054
    %v2103 = vunpack.c.l.bf16 %v2055
    %v2104 = vunpack.c.l.bf16 %v2056
    %v2105 = vunpack.c.l.bf16 %v2057
    %v2106 = vunpack.c.l.bf16 %v2058
    %v2107 = vmul.f32 %v66, %v2059
    %v2108 = vmul.f32 %v67, %v2060
    %v2109 = vmul.f32 %v68, %v2061
    %v2110 = vmul.f32 %v69, %v2062
    %v2111 = vmul.f32 %v70, %v2063
    %v2112 = vmul.f32 %v71, %v2064
    %v2113 = vmul.f32 %v72, %v2065
    %v2114 = vmul.f32 %v73, %v2066
    %v2115 = vmul.f32 %v74, %v2067
    %v2116 = vmul.f32 %v75, %v2068
    %v2117 = vmul.f32 %v76, %v2069
    %v2118 = vmul.f32 %v77, %v2070
    %v2119 = vmul.f32 %v78, %v2071
    %v2120 = vmul.f32 %v79, %v2072
    %v2121 = vmul.f32 %v80, %v2073
    %v2122 = vmul.f32 %v81, %v2074
    %v2123 = vmul.f32 %v82, %v2075
    %v2124 = vmul.f32 %v83, %v2076
    %v2125 = vmul.f32 %v84, %v2077
    %v2126 = vmul.f32 %v85, %v2078
    %v2127 = vmul.f32 %v86, %v2079
    %v2128 = vmul.f32 %v87, %v2080
    %v2129 = vmul.f32 %v88, %v2081
    %v2130 = vmul.f32 %v89, %v2082
    %v2131 = vmul.f32 %v90, %v2083
    %v2132 = vmul.f32 %v91, %v2084
    %v2133 = vmul.f32 %v92, %v2085
    %v2134 = vmul.f32 %v93, %v2086
    %v2135 = vmul.f32 %v94, %v2087
    %v2136 = vmul.f32 %v95, %v2088
    %v2137 = vmul.f32 %v96, %v2089
    %v2138 = vmul.f32 %v97, %v2090
    %v2139 = vmul.f32 %v98, %v2091
    %v2140 = vmul.f32 %v99, %v2092
    %v2141 = vmul.f32 %v100, %v2093
    %v2142 = vmul.f32 %v101, %v2094
    %v2143 = vmul.f32 %v102, %v2095
    %v2144 = vmul.f32 %v103, %v2096
    %v2145 = vmul.f32 %v104, %v2097
    %v2146 = vmul.f32 %v105, %v2098
    %v2147 = vmul.f32 %v106, %v2099
    %v2148 = vmul.f32 %v107, %v2100
    %v2149 = vmul.f32 %v108, %v2101
    %v2150 = vmul.f32 %v109, %v2102
    %v2151 = vmul.f32 %v110, %v2103
    %v2152 = vmul.f32 %v111, %v2104
    %v2153 = vmul.f32 %v112, %v2105
    %v2154 = vmul.f32 %v113, %v2106
    %v2155 = vsel %vm354, %v2107, 0.0
    %v2156 = vsel %vm354, %v2108, 0.0
    %v2157 = vadd.f32 %v2155, %v2156
    %v2158 = vsel %vm354, %v2109, 0.0
    %v2159 = vadd.f32 %v2157, %v2158
    %v2160 = vsel %vm354, %v2110, 0.0
    %v2161 = vadd.f32 %v2159, %v2160
    %v2162 = vsel %vm354, %v2111, 0.0
    %v2163 = vadd.f32 %v2161, %v2162
    %v2164 = vsel %vm354, %v2112, 0.0
    %v2165 = vadd.f32 %v2163, %v2164
    %v2166 = vsel %vm354, %v2113, 0.0
    %v2167 = vadd.f32 %v2165, %v2166
    %v2168 = vsel %vm354, %v2114, 0.0
    %v2169 = vadd.f32 %v2167, %v2168
    %v2170 = vsel %vm354, %v2115, 0.0
    %v2171 = vadd.f32 %v2169, %v2170
    %v2172 = vsel %vm354, %v2116, 0.0
    %v2173 = vadd.f32 %v2171, %v2172
    %v2174 = vsel %vm354, %v2117, 0.0
    %v2175 = vadd.f32 %v2173, %v2174
    %v2176 = vsel %vm354, %v2118, 0.0
    %v2177 = vadd.f32 %v2175, %v2176
    %v2178 = vsel %vm354, %v2119, 0.0
    %v2179 = vadd.f32 %v2177, %v2178
    %v2180 = vsel %vm354, %v2120, 0.0
    %v2181 = vadd.f32 %v2179, %v2180
    %v2182 = vsel %vm354, %v2121, 0.0
    %v2183 = vadd.f32 %v2181, %v2182
    %v2184 = vsel %vm354, %v2122, 0.0
    %v2185 = vadd.f32 %v2183, %v2184
    %v2186 = vsel %vm354, %v2123, 0.0
    %v2187 = vadd.f32 %v2185, %v2186
    %v2188 = vsel %vm354, %v2124, 0.0
    %v2189 = vadd.f32 %v2187, %v2188
    %v2190 = vsel %vm354, %v2125, 0.0
    %v2191 = vadd.f32 %v2189, %v2190
    %v2192 = vsel %vm354, %v2126, 0.0
    %v2193 = vadd.f32 %v2191, %v2192
    %v2194 = vsel %vm354, %v2127, 0.0
    %v2195 = vadd.f32 %v2193, %v2194
    %v2196 = vsel %vm354, %v2128, 0.0
    %v2197 = vadd.f32 %v2195, %v2196
    %v2198 = vsel %vm354, %v2129, 0.0
    %v2199 = vadd.f32 %v2197, %v2198
    %v2200 = vsel %vm354, %v2130, 0.0
    %v2201 = vadd.f32 %v2199, %v2200
    %v2202 = vsel %vm354, %v2131, 0.0
    %v2203 = vadd.f32 %v2201, %v2202
    %v2204 = vsel %vm354, %v2132, 0.0
    %v2205 = vadd.f32 %v2203, %v2204
    %v2206 = vsel %vm354, %v2133, 0.0
    %v2207 = vadd.f32 %v2205, %v2206
    %v2208 = vsel %vm354, %v2134, 0.0
    %v2209 = vadd.f32 %v2207, %v2208
    %v2210 = vsel %vm354, %v2135, 0.0
    %v2211 = vadd.f32 %v2209, %v2210
    %v2212 = vsel %vm354, %v2136, 0.0
    %v2213 = vadd.f32 %v2211, %v2212
    %v2214 = vsel %vm354, %v2137, 0.0
    %v2215 = vadd.f32 %v2213, %v2214
    %v2216 = vsel %vm354, %v2138, 0.0
    %v2217 = vadd.f32 %v2215, %v2216
    %v2218 = vsel %vm354, %v2139, 0.0
    %v2219 = vadd.f32 %v2217, %v2218
    %v2220 = vsel %vm354, %v2140, 0.0
    %v2221 = vadd.f32 %v2219, %v2220
    %v2222 = vsel %vm354, %v2141, 0.0
    %v2223 = vadd.f32 %v2221, %v2222
    %v2224 = vsel %vm354, %v2142, 0.0
    %v2225 = vadd.f32 %v2223, %v2224
    %v2226 = vsel %vm354, %v2143, 0.0
    %v2227 = vadd.f32 %v2225, %v2226
    %v2228 = vsel %vm354, %v2144, 0.0
    %v2229 = vadd.f32 %v2227, %v2228
    %v2230 = vsel %vm354, %v2145, 0.0
    %v2231 = vadd.f32 %v2229, %v2230
    %v2232 = vsel %vm354, %v2146, 0.0
    %v2233 = vadd.f32 %v2231, %v2232
    %v2234 = vsel %vm354, %v2147, 0.0
    %v2235 = vadd.f32 %v2233, %v2234
    %v2236 = vsel %vm354, %v2148, 0.0
    %v2237 = vadd.f32 %v2235, %v2236
    %v2238 = vsel %vm354, %v2149, 0.0
    %v2239 = vadd.f32 %v2237, %v2238
    %v2240 = vsel %vm354, %v2150, 0.0
    %v2241 = vadd.f32 %v2239, %v2240
    %v2242 = vsel %vm354, %v2151, 0.0
    %v2243 = vadd.f32 %v2241, %v2242
    %v2244 = vsel %vm354, %v2152, 0.0
    %v2245 = vadd.f32 %v2243, %v2244
    %v2246 = vsel %vm354, %v2153, 0.0
    %v2247 = vadd.f32 %v2245, %v2246
    %v2248 = vsel %vm354, %v2154, 0.0
    %v2249 = vadd.f32 %v2247, %v2248
    %v2250 = vrot.slane %v2249, 4
    %v2251 = vadd.f32 %v2249, %v2250
    %v2252 = vrot.slane %v2251, 2
    %v2253 = vadd.f32 %v2251, %v2252
    %v2254 = vrot.slane %v2253, 1
    %v2255 = vadd.f32 %v2253, %v2254
    %v2256 = vmul.f32 %v2059, %v2059
    %v2257 = vmul.f32 %v2060, %v2060
    %v2258 = vmul.f32 %v2061, %v2061
    %v2259 = vmul.f32 %v2062, %v2062
    %v2260 = vmul.f32 %v2063, %v2063
    %v2261 = vmul.f32 %v2064, %v2064
    %v2262 = vmul.f32 %v2065, %v2065
    %v2263 = vmul.f32 %v2066, %v2066
    %v2264 = vmul.f32 %v2067, %v2067
    %v2265 = vmul.f32 %v2068, %v2068
    %v2266 = vmul.f32 %v2069, %v2069
    %v2267 = vmul.f32 %v2070, %v2070
    %v2268 = vmul.f32 %v2071, %v2071
    %v2269 = vmul.f32 %v2072, %v2072
    %v2270 = vmul.f32 %v2073, %v2073
    %v2271 = vmul.f32 %v2074, %v2074
    %v2272 = vmul.f32 %v2075, %v2075
    %v2273 = vmul.f32 %v2076, %v2076
    %v2274 = vmul.f32 %v2077, %v2077
    %v2275 = vmul.f32 %v2078, %v2078
    %v2276 = vmul.f32 %v2079, %v2079
    %v2277 = vmul.f32 %v2080, %v2080
    %v2278 = vmul.f32 %v2081, %v2081
    %v2279 = vmul.f32 %v2082, %v2082
    %v2280 = vmul.f32 %v2083, %v2083
    %v2281 = vmul.f32 %v2084, %v2084
    %v2282 = vmul.f32 %v2085, %v2085
    %v2283 = vmul.f32 %v2086, %v2086
    %v2284 = vmul.f32 %v2087, %v2087
    %v2285 = vmul.f32 %v2088, %v2088
    %v2286 = vmul.f32 %v2089, %v2089
    %v2287 = vmul.f32 %v2090, %v2090
    %v2288 = vmul.f32 %v2091, %v2091
    %v2289 = vmul.f32 %v2092, %v2092
    %v2290 = vmul.f32 %v2093, %v2093
    %v2291 = vmul.f32 %v2094, %v2094
    %v2292 = vmul.f32 %v2095, %v2095
    %v2293 = vmul.f32 %v2096, %v2096
    %v2294 = vmul.f32 %v2097, %v2097
    %v2295 = vmul.f32 %v2098, %v2098
    %v2296 = vmul.f32 %v2099, %v2099
    %v2297 = vmul.f32 %v2100, %v2100
    %v2298 = vmul.f32 %v2101, %v2101
    %v2299 = vmul.f32 %v2102, %v2102
    %v2300 = vmul.f32 %v2103, %v2103
    %v2301 = vmul.f32 %v2104, %v2104
    %v2302 = vmul.f32 %v2105, %v2105
    %v2303 = vmul.f32 %v2106, %v2106
    %v2304 = vsel %vm354, %v2256, 0.0
    %v2305 = vsel %vm354, %v2257, 0.0
    %v2306 = vadd.f32 %v2304, %v2305
    %v2307 = vsel %vm354, %v2258, 0.0
    %v2308 = vadd.f32 %v2306, %v2307
    %v2309 = vsel %vm354, %v2259, 0.0
    %v2310 = vadd.f32 %v2308, %v2309
    %v2311 = vsel %vm354, %v2260, 0.0
    %v2312 = vadd.f32 %v2310, %v2311
    %v2313 = vsel %vm354, %v2261, 0.0
    %v2314 = vadd.f32 %v2312, %v2313
    %v2315 = vsel %vm354, %v2262, 0.0
    %v2316 = vadd.f32 %v2314, %v2315
    %v2317 = vsel %vm354, %v2263, 0.0
    %v2318 = vadd.f32 %v2316, %v2317
    %v2319 = vsel %vm354, %v2264, 0.0
    %v2320 = vadd.f32 %v2318, %v2319
    %v2321 = vsel %vm354, %v2265, 0.0
    %v2322 = vadd.f32 %v2320, %v2321
    %v2323 = vsel %vm354, %v2266, 0.0
    %v2324 = vadd.f32 %v2322, %v2323
    %v2325 = vsel %vm354, %v2267, 0.0
    %v2326 = vadd.f32 %v2324, %v2325
    %v2327 = vsel %vm354, %v2268, 0.0
    %v2328 = vadd.f32 %v2326, %v2327
    %v2329 = vsel %vm354, %v2269, 0.0
    %v2330 = vadd.f32 %v2328, %v2329
    %v2331 = vsel %vm354, %v2270, 0.0
    %v2332 = vadd.f32 %v2330, %v2331
    %v2333 = vsel %vm354, %v2271, 0.0
    %v2334 = vadd.f32 %v2332, %v2333
    %v2335 = vsel %vm354, %v2272, 0.0
    %v2336 = vadd.f32 %v2334, %v2335
    %v2337 = vsel %vm354, %v2273, 0.0
    %v2338 = vadd.f32 %v2336, %v2337
    %v2339 = vsel %vm354, %v2274, 0.0
    %v2340 = vadd.f32 %v2338, %v2339
    %v2341 = vsel %vm354, %v2275, 0.0
    %v2342 = vadd.f32 %v2340, %v2341
    %v2343 = vsel %vm354, %v2276, 0.0
    %v2344 = vadd.f32 %v2342, %v2343
    %v2345 = vsel %vm354, %v2277, 0.0
    %v2346 = vadd.f32 %v2344, %v2345
    %v2347 = vsel %vm354, %v2278, 0.0
    %v2348 = vadd.f32 %v2346, %v2347
    %v2349 = vsel %vm354, %v2279, 0.0
    %v2350 = vadd.f32 %v2348, %v2349
    %v2351 = vsel %vm354, %v2280, 0.0
    %v2352 = vadd.f32 %v2350, %v2351
    %v2353 = vsel %vm354, %v2281, 0.0
    %v2354 = vadd.f32 %v2352, %v2353
    %v2355 = vsel %vm354, %v2282, 0.0
    %v2356 = vadd.f32 %v2354, %v2355
    %v2357 = vsel %vm354, %v2283, 0.0
    %v2358 = vadd.f32 %v2356, %v2357
    %v2359 = vsel %vm354, %v2284, 0.0
    %v2360 = vadd.f32 %v2358, %v2359
    %v2361 = vsel %vm354, %v2285, 0.0
    %v2362 = vadd.f32 %v2360, %v2361
    %v2363 = vsel %vm354, %v2286, 0.0
    %v2364 = vadd.f32 %v2362, %v2363
    %v2365 = vsel %vm354, %v2287, 0.0
    %v2366 = vadd.f32 %v2364, %v2365
    %v2367 = vsel %vm354, %v2288, 0.0
    %v2368 = vadd.f32 %v2366, %v2367
    %v2369 = vsel %vm354, %v2289, 0.0
    %v2370 = vadd.f32 %v2368, %v2369
    %v2371 = vsel %vm354, %v2290, 0.0
    %v2372 = vadd.f32 %v2370, %v2371
    %v2373 = vsel %vm354, %v2291, 0.0
    %v2374 = vadd.f32 %v2372, %v2373
    %v2375 = vsel %vm354, %v2292, 0.0
    %v2376 = vadd.f32 %v2374, %v2375
    %v2377 = vsel %vm354, %v2293, 0.0
    %v2378 = vadd.f32 %v2376, %v2377
    %v2379 = vsel %vm354, %v2294, 0.0
    %v2380 = vadd.f32 %v2378, %v2379
    %v2381 = vsel %vm354, %v2295, 0.0
    %v2382 = vadd.f32 %v2380, %v2381
    %v2383 = vsel %vm354, %v2296, 0.0
    %v2384 = vadd.f32 %v2382, %v2383
    %v2385 = vsel %vm354, %v2297, 0.0
    %v2386 = vadd.f32 %v2384, %v2385
    %v2387 = vsel %vm354, %v2298, 0.0
    %v2388 = vadd.f32 %v2386, %v2387
    %v2389 = vsel %vm354, %v2299, 0.0
    %v2390 = vadd.f32 %v2388, %v2389
    %v2391 = vsel %vm354, %v2300, 0.0
    %v2392 = vadd.f32 %v2390, %v2391
    %v2393 = vsel %vm354, %v2301, 0.0
    %v2394 = vadd.f32 %v2392, %v2393
    %v2395 = vsel %vm354, %v2302, 0.0
    %v2396 = vadd.f32 %v2394, %v2395
    %v2397 = vsel %vm354, %v2303, 0.0
    %v2398 = vadd.f32 %v2396, %v2397
    %v2399 = vrot.slane %v2398, 4
    %v2400 = vadd.f32 %v2398, %v2399
    %v2401 = vrot.slane %v2400, 2
    %v2402 = vadd.f32 %v2400, %v2401
    %v2403 = vrot.slane %v2402, 1
    %v2404 = vadd.f32 %v2402, %v2403
    %v2405 = vmul.f32 %v455, %v2404
    %v2406 = vmax.f32 %v2405, 1e-16
    %v2407 = vrsqrt.pop %v2406
    %v2408 = vmul.f32 %v2255, %v2407
    %v2409 = vadd.f32 %v2010, %v2408
    %v2410 = vmul.f32 %v2409, 0.33333334
    %v2411 = vsub.f32 %v1059, %v906
    %v2412 = vsub.f32 %v2410, %v906
    %v2413 = vsub.f32 1.0, %v1212
    %v2414 = vmul.f32 %v2412, 0.5
    %v2415 = vadd.f32 %v2411, %v2414
    %v2416 = vmul.f32 %v2413, 2.0
    %v2417 = vadd.f32 %v2415, %v2416
    %vm2418 = vcmask 24576
    %2419 = vst.msk [vmem:[#allocation2] sm:$0x1] %vm2418, %v2417
    // Predicated region
    $region18: #{tpu_custom_call.1} parent=1 // pred_check
      _
    $region19: #{tpu_custom_call.1} parent=1 // pred_check_branch
      %2421 = sbr.rel (0) target = $region21
    $region20: #{tpu_custom_call.1} parent=1 // pred_region
      %s2423 = ssub.s32 16, 16
      %2424 = vsyncadd [#allocation3], %s2423
      %s2426 = sshll.u32 [#allocation2], 4
      %s2427 = int_to_ptr.vmem [resolvable:$true] %s2426
      %2429 = dma.vmem_to_hbm [thread:$0]  %s2427, 16, %s4, [#allocation3]
    $region21: #{tpu_custom_call.1} parent=1 // pred_fallthru
      _
    // Predicated region
    $region22: #{tpu_custom_call.1} parent=1 // pred_check
      _
    $region23: #{tpu_custom_call.1} parent=1 // pred_check_branch
      %2431 = sbr.rel (0) target = $region25
    $region24: #{tpu_custom_call.1} parent=1 // pred_region
      %2432 = dma.done [#allocation3], 16
    $region25: #{tpu_custom_call.1} parent=1 // pred_fallthru
      _
    %2433 = vsyncpa [#allocation3], 1

</llo_original>
